<compile_context>
chip_gen: v7x
topology: tpu7x:2x2x1
jax: 0.10.0
libtpu: 0.0.40
codegen_flags: <defaults>
</compile_context>

<pallas_src>
import functools

import jax
import jax.numpy as jnp
from jax.experimental import pallas as pl
from jax.experimental.pallas import tpu as pltpu


def _round_up(x, m):
    return ((x + m - 1) // m) * m


def _cdiv(a, b):
    return (a + b - 1) // b


# --------------------------------------------------------------------------------------
# Fused kernel: per-chunk input projection + GRU recurrence + (last chunk) Linear proj
# --------------------------------------------------------------------------------------
def _gru_fused_kernel(x_ref, wih_ref, bcomb_ref, whh_ref, bhn_ref, wproj_ref,
                      bproj_ref, out_ref, h_scratch, gi_scratch,
                      *, hp, tc, seq_len, padded_len, unroll):
    """One grid step = `tc` timesteps of one batch block.

    Grid = (batch_blocks, time_chunks); time axis is innermost and serial.
    x_ref is a (tc*Bb, D) row-block (time-major within the block).
    """
    c = pl.program_id(1)                       # time-chunk index (serial axis)
    bb = h_scratch.shape[0]                    # padded batch-block rows (multiple of 8)

    # Fresh hidden state at the start of every batch block's time sweep.
    @pl.when(c == 0)
    def _():
        h_scratch[...] = jnp.zeros_like(h_scratch)

    # ---- fused input projection for this chunk: ONE MXU matmul over tc*bb rows -----
    # Independent of h; stored to VMEM scratch so the unrolled loop reloads per-step
    # slices instead of keeping a chunk-sized value live in vregs.
    gi_scratch[...] = (
        jnp.dot(x_ref[...], wih_ref[...], preferred_element_type=jnp.float32)
        + bcomb_ref[...]
    )

    # Hoisted constants (JAX does not CSE per-iteration loads/broadcasts).
    whh = whh_ref[...]                                     # (hp, 3hp)
    bhn = jnp.broadcast_to(bhn_ref[...], (bb, hp))         # (bb, hp)

    def step(tt, h):
        row0 = pl.multiple_of(tt * bb, 8)
        gi_t = gi_scratch[pl.ds(row0, bb), :]              # (bb, 3hp) per-step vld
        gh = jnp.dot(h, whh, preferred_element_type=jnp.float32)   # (bb, 3hp) MXU
        # Gate slices are whole 128-lane tiles (hp is a multiple of 128).
        r = jax.nn.sigmoid(gi_t[:, 0 * hp:1 * hp] + gh[:, 0 * hp:1 * hp])
        z = jax.nn.sigmoid(gi_t[:, 1 * hp:2 * hp] + gh[:, 1 * hp:2 * hp])
        n = jnp.tanh(gi_t[:, 2 * hp:3 * hp] + r * (gh[:, 2 * hp:3 * hp] + bhn))
        h_new = (1.0 - z) * n + z * h
        if padded_len != seq_len:
            # Masked ragged tail: padded timesteps leave h untouched.
            h_new = jnp.where(c * tc + tt < seq_len, h_new, h)
        return h_new

    h_scratch[...] = jax.lax.fori_loop(0, tc, step, h_scratch[...], unroll=unroll)

    # Fused output projection on the last time chunk of this batch block.
    # (Output block index only changes with the batch axis, so the single write here
    #  is what gets written back to HBM; keep the write inside this guard.)
    @pl.when(c == pl.num_programs(1) - 1)
    def _():
        proj = jnp.dot(h_scratch[...], wproj_ref[...],
                       preferred_element_type=jnp.float32) + bproj_ref[...]
        out_ref[...] = proj.astype(out_ref.dtype)


def _pick_time_chunk(T, bb, d, hp, op, max_chunk=32, vmem_budget=12 * 1024 * 1024):
    """Largest chunk of timesteps per grid step that fits the VMEM budget (>= 1)."""
    fixed = 4 * (2 * (d * 3 * hp + 3 * hp + hp * 3 * hp + hp + hp * op + op)
                 + bb * hp + 2 * bb * op)
    tc = max(1, min(max_chunk, T))
    while tc > 1:
        per_chunk = 4 * (2 * tc * bb * d + tc * bb * 3 * hp)   # x (dbl-buffered) + gi
        if fixed + per_chunk <= vmem_budget:
            break
        tc -= 1
    return tc


def gru_encoder_pallas(x, params):
    """x: (B, T, D) float32 (batch_first, like the PyTorch module). Returns (B, O)."""
    B, T, D = x.shape
    H = params["w_hh_t"].shape[0]
    O = params["w_proj_t"].shape[1]
    f32 = jnp.float32

    # ---- padded, lane-aligned sizes -------------------------------------------------
    Hp = _round_up(H, 128)            # each gate slab is whole 128-lane tiles
    Op = _round_up(O, 128)            # lane-dense output store
    n_bblk = 2 if B > 8 else 1        # batch shards -> megacore-parallel on v7x
    Bb = _round_up(_cdiv(B, n_bblk), 8)
    Bp = Bb * n_bblk

    tc = _pick_time_chunk(T, Bb, D, Hp, Op)
    n_chunks = _cdiv(T, tc)
    Tp = n_chunks * tc

    # ---- padded, gate-blocked parameters (built once, outside the kernel) -----------
    def pad_gates(w, rows_out):
        rows = w.shape[0]
        out = jnp.zeros((rows_out, 3 * Hp), f32)
        for g in range(3):
            out = out.at[:rows, g * Hp:g * Hp + H].set(w[:, g * H:(g + 1) * H])
        return out

    w_ih_p = pad_gates(params["w_ih_t"], D)            # (D, 3Hp)
    w_hh_p = pad_gates(params["w_hh_t"], Hp)           # (Hp, 3Hp), padded rows = 0
    # Fold b_ih (all gates) + b_hh (r,z) into the precomputed gi; keep b_hh_n separate
    # (it must stay inside the r-gated term of the n gate) -- exact PyTorch GRU math.
    b_comb = params["b_ih"] + jnp.concatenate(
        [params["b_hh"][:, :2 * H], jnp.zeros((1, H), f32)], axis=1)
    b_comb_p = pad_gates(b_comb, 1)                    # (1, 3Hp)
    b_hh_n_p = jnp.zeros((1, Hp), f32).at[:, :H].set(params["b_hh"][:, 2 * H:])
    w_proj_p = jnp.zeros((Hp, Op), f32).at[:H, :O].set(params["w_proj_t"])
    b_proj_p = jnp.zeros((1, Op), f32).at[:, :O].set(params["b_proj"])

    # ---- time-major, padded, batch-blocked input: rows = (b_blk, t, b_in_blk) -------
    x_tm = jnp.transpose(x, (1, 0, 2))                                  # (T, B, D)
    x_pad = jnp.zeros((Tp, Bp, D), f32).at[:T, :B, :].set(x_tm)
    x_blk = (x_pad.reshape(Tp, n_bblk, Bb, D)
             .transpose(1, 0, 2, 3)
             .reshape(n_bblk * Tp * Bb, D))                             # (n_bblk*Tp*Bb, D)

    kernel = functools.partial(
        _gru_fused_kernel, hp=Hp, tc=tc, seq_len=T, padded_len=Tp,
        unroll=min(tc, 8))

    # TODO(synk): pipeline_mode=pl.Buffered(1) on the constant-index weight BlockSpecs
    # would halve their resident VMEM (matters most under v7x's 64 MiB ceiling).
    out_p = pl.pallas_call(
        kernel,
        out_shape=jax.ShapeDtypeStruct((Bp, Op), f32),
        grid_spec=pltpu.PrefetchScalarGridSpec(
            num_scalar_prefetch=0,
            grid=(n_bblk, n_chunks),
            in_specs=[
                pl.BlockSpec((tc * Bb, D), lambda b, c: (b * n_chunks + c, 0)),  # x chunk
                pl.BlockSpec((D, 3 * Hp), lambda b, c: (0, 0)),        # W_ih^T (const)
                pl.BlockSpec((1, 3 * Hp), lambda b, c: (0, 0)),        # folded bias
                pl.BlockSpec((Hp, 3 * Hp), lambda b, c: (0, 0)),       # W_hh^T (const)
                pl.BlockSpec((1, Hp), lambda b, c: (0, 0)),            # b_hh (n gate)
                pl.BlockSpec((Hp, Op), lambda b, c: (0, 0)),           # W_proj^T
                pl.BlockSpec((1, Op), lambda b, c: (0, 0)),            # b_proj
            ],
            out_specs=pl.BlockSpec((Bb, Op), lambda b, c: (b, 0)),
            scratch_shapes=[
                pltpu.VMEM((Bb, Hp), f32),                # persistent hidden state
                pltpu.VMEM((tc * Bb, 3 * Hp), f32),       # per-chunk input gates gi
            ],
        ),
        compiler_params=pltpu.CompilerParams(
            dimension_semantics=("parallel", "arbitrary"),  # batch ||, time serial
            vmem_limit_bytes=32 * 1024 * 1024,
        ),
    )(x_blk, w_ih_p, b_comb_p, w_hh_p, b_hh_n_p, w_proj_p, b_proj_p)

    return out_p[:B, :O]


# --------------------------------------------------------------------------------------
# Pure-JAX reference matching torch.nn.GRU (1 layer, batch_first) + Linear
# --------------------------------------------------------------------------------------
def gru_encoder_ref(x, params):
    B, T, D = x.shape
    H = params["w_hh_t"].shape[0]

    def step(h, x_t):
        gi = x_t @ params["w_ih_t"] + params["b_ih"][0]
        gh = h @ params["w_hh_t"] + params["b_hh"][0]
        r = jax.nn.sigmoid(gi[:, :H] + gh[:, :H])
        z = jax.nn.sigmoid(gi[:, H:2 * H] + gh[:, H:2 * H])
        n = jnp.tanh(gi[:, 2 * H:] + r * gh[:, 2 * H:])
        h_new = (1.0 - z) * n + z * h
        return h_new, None

    h0 = jnp.zeros((B, H), jnp.float32)
    h_last, _ = jax.lax.scan(step, h0, jnp.transpose(x, (1, 0, 2)))
    return h_last @ params["w_proj_t"] + params["b_proj"][0]


def init_params(key, input_dim, hidden_dim, output_dim):
    """Deterministic parameter init (uniform, PyTorch-style scaling), pre-transposed."""
    ks = jax.random.split(key, 6)
    s = 1.0 / jnp.sqrt(hidden_dim)
    return {
        "w_ih_t": jax.random.uniform(ks[0], (input_dim, 3 * hidden_dim),
                                     jnp.float32, -s, s),
        "w_hh_t": jax.random.uniform(ks[1], (hidden_dim, 3 * hidden_dim),
                                     jnp.float32, -s, s),
        "b_ih": jax.random.uniform(ks[2], (1, 3 * hidden_dim), jnp.float32, -s, s),
        "b_hh": jax.random.uniform(ks[3], (1, 3 * hidden_dim), jnp.float32, -s, s),
        "w_proj_t": jax.random.uniform(ks[4], (hidden_dim, output_dim),
                                       jnp.float32, -s, s),
        "b_proj": jax.random.uniform(ks[5], (1, output_dim), jnp.float32, -s, s),
    }


if __name__ == "__main__":
    B, T, D = 2, 8, 16        # batch, seq, input_dim
    H, O = 32, 16             # hidden_dim, output_dim

    key = jax.random.PRNGKey(0)
    k_x, k_p = jax.random.split(key)
    x = jax.random.normal(k_x, (B, T, D), dtype=jnp.float32)
    params = init_params(k_p, D, H, O)

    out = gru_encoder_pallas(x, params)
    out = jax.block_until_ready(out)

    ref = gru_encoder_ref(x, params)
    assert out.shape == (B, O)
    assert jnp.allclose(out, ref, atol=1e-5, rtol=1e-5), (
        f"max abs err = {jnp.max(jnp.abs(out - ref))}")

    print("KERNEL_OK")
</pallas_src>

<mosaic_0001>
module attributes {stable_mosaic.version = 11 : i64} {
  func.func @_gru_fused_kernel(%arg0: i32, %arg1: i32, %arg2: memref<64x16xf32, #tpu.memory_space<vmem>>, %arg3: memref<16x384xf32, #tpu.memory_space<vmem>>, %arg4: memref<1x384xf32, #tpu.memory_space<vmem>>, %arg5: memref<128x384xf32, #tpu.memory_space<vmem>>, %arg6: memref<1x128xf32, #tpu.memory_space<vmem>>, %arg7: memref<128x128xf32, #tpu.memory_space<vmem>>, %arg8: memref<1x128xf32, #tpu.memory_space<vmem>>, %arg9: memref<8x128xf32, #tpu.memory_space<vmem>>, %arg10: memref<8x128xf32, #tpu.memory_space<vmem>>, %arg11: memref<64x384xf32, #tpu.memory_space<vmem>>) attributes {dimension_semantics = [#tpu.dimension_semantics<parallel>, #tpu.dimension_semantics<arbitrary>], iteration_bounds = array<i64: 1, 1>, scalar_prefetch = 0 : i64, scratch_operands = 2 : i64, tpu.core_type = #tpu.core_type<tc>, window_params = [{transform_indices = @transform_0, window_bounds = array<i64: 64, 16>}, {pipeline_mode = #tpu.pipeline_mode<synchronous>, transform_indices = @transform_1, window_bounds = array<i64: 16, 384>}, {pipeline_mode = #tpu.pipeline_mode<synchronous>, transform_indices = @transform_2, window_bounds = array<i64: 1, 384>}, {pipeline_mode = #tpu.pipeline_mode<synchronous>, transform_indices = @transform_3, window_bounds = array<i64: 128, 384>}, {pipeline_mode = #tpu.pipeline_mode<synchronous>, transform_indices = @transform_4, window_bounds = array<i64: 1, 128>}, {pipeline_mode = #tpu.pipeline_mode<synchronous>, transform_indices = @transform_5, window_bounds = array<i64: 128, 128>}, {pipeline_mode = #tpu.pipeline_mode<synchronous>, transform_indices = @transform_6, window_bounds = array<i64: 1, 128>}, {transform_indices = @transform_7, window_bounds = array<i64: 8, 128>}]} {
    %c0_i32 = arith.constant 0 : i32
    %0 = arith.cmpi eq, %arg1, %c0_i32 : i32
    %1 = arith.extui %0 : i1 to i32
    %c0_i32_0 = arith.constant 0 : i32
    %2 = arith.cmpi ne, %1, %c0_i32_0 : i32
    scf.if %2 {
      %cst_67 = arith.constant 0.000000e+00 : f32
      %275 = vector.broadcast %cst_67 : f32 to vector<8x128xf32>
      %c0_68 = arith.constant 0 : index
      %c0_69 = arith.constant 0 : index
      %276 = vector.load %arg10[%c0_68, %c0_69] : memref<8x128xf32, #tpu.memory_space<vmem>>, vector<8x128xf32>
      tpu.vector_store %arg10[%c0_68, %c0_69], %275 {strides = array<i32>} : memref<8x128xf32, #tpu.memory_space<vmem>>, vector<8x128xf32>,
    } else {
    }
    %c0 = arith.constant 0 : index
    %c0_1 = arith.constant 0 : index
    %3 = vector.load %arg2[%c0, %c0_1] : memref<64x16xf32, #tpu.memory_space<vmem>>, vector<64x16xf32>
    %c0_2 = arith.constant 0 : index
    %c0_3 = arith.constant 0 : index
    %4 = vector.load %arg3[%c0_2, %c0_3] : memref<16x384xf32, #tpu.memory_space<vmem>>, vector<16x384xf32>
    %cst = arith.constant dense<0.000000e+00> : vector<64x384xf32>
    %5 = tpu.matmul %3, %4, %cst {dimension_numbers = #tpu.dot_dimension_numbers<[1], [0], [0], [1], [0, 0, 1, 1], [], []>} : vector<64x16xf32>, vector<16x384xf32>, vector<64x384xf32> -> vector<64x384xf32>
    %c0_4 = arith.constant 0 : index
    %c0_5 = arith.constant 0 : index
    %6 = vector.load %arg4[%c0_4, %c0_5] : memref<1x384xf32, #tpu.memory_space<vmem>>, vector<1x384xf32>
    %7 = vector.broadcast %6 : vector<1x384xf32> to vector<64x384xf32>
    %8 = arith.addf %5, %7 : vector<64x384xf32>
    %c0_6 = arith.constant 0 : index
    %c0_7 = arith.constant 0 : index
    %9 = vector.load %arg11[%c0_6, %c0_7] : memref<64x384xf32, #tpu.memory_space<vmem>>, vector<64x384xf32>
    tpu.vector_store %arg11[%c0_6, %c0_7], %8 {strides = array<i32>} : memref<64x384xf32, #tpu.memory_space<vmem>>, vector<64x384xf32>,
    %c0_8 = arith.constant 0 : index
    %c0_9 = arith.constant 0 : index
    %10 = vector.load %arg5[%c0_8, %c0_9] : memref<128x384xf32, #tpu.memory_space<vmem>>, vector<128x384xf32>
    %c0_10 = arith.constant 0 : index
    %c0_11 = arith.constant 0 : index
    %11 = vector.load %arg6[%c0_10, %c0_11] : memref<1x128xf32, #tpu.memory_space<vmem>>, vector<1x128xf32>
    %12 = vector.shape_cast %11 : vector<1x128xf32> to vector<1x128xf32>
    %13 = vector.broadcast %12 : vector<1x128xf32> to vector<8x128xf32>
    %c0_12 = arith.constant 0 : index
    %c0_13 = arith.constant 0 : index
    %14 = vector.load %arg10[%c0_12, %c0_13] : memref<8x128xf32, #tpu.memory_space<vmem>>, vector<8x128xf32>
    %c0_i32_14 = arith.constant 0 : i32
    %c8_i32 = arith.constant 8 : i32
    %15 = arith.muli %c0_i32_14, %c8_i32 : i32
    %16 = tpu.assume_multiple %15, 8 : i32
    %17 = arith.index_cast %16 : i32 to index
    %c0_15 = arith.constant 0 : index
    %18 = vector.load %arg11[%17, %c0_15] : memref<64x384xf32, #tpu.memory_space<vmem>>, vector<8x384xf32>
    %cst_16 = arith.constant dense<0.000000e+00> : vector<8x384xf32>
    %19 = tpu.matmul %14, %10, %cst_16 {dimension_numbers = #tpu.dot_dimension_numbers<[1], [0], [0], [1], [0, 0, 1, 1], [], []>} : vector<8x128xf32>, vector<128x384xf32>, vector<8x384xf32> -> vector<8x384xf32>
    %20 = vector.extract_strided_slice %18 {offsets = [0, 0], sizes = [8, 128], strides = [1, 1]} : vector<8x384xf32> to vector<8x128xf32>
    %21 = vector.extract_strided_slice %19 {offsets = [0, 0], sizes = [8, 128], strides = [1, 1]} : vector<8x384xf32> to vector<8x128xf32>
    %22 = arith.addf %20, %21 : vector<8x128xf32>
    %23 = arith.negf %22 : vector<8x128xf32>
    %24 = math.exp %23 : vector<8x128xf32>
    %cst_17 = arith.constant 1.000000e+00 : f32
    %25 = vector.broadcast %cst_17 : f32 to vector<8x128xf32>
    %26 = arith.addf %25, %24 : vector<8x128xf32>
    %27 = arith.divf %25, %26 : vector<8x128xf32>
    %28 = vector.extract_strided_slice %18 {offsets = [0, 128], sizes = [8, 128], strides = [1, 1]} : vector<8x384xf32> to vector<8x128xf32>
    %29 = vector.extract_strided_slice %19 {offsets = [0, 128], sizes = [8, 128], strides = [1, 1]} : vector<8x384xf32> to vector<8x128xf32>
    %30 = arith.addf %28, %29 : vector<8x128xf32>
    %31 = arith.negf %30 : vector<8x128xf32>
    %32 = math.exp %31 : vector<8x128xf32>
    %cst_18 = arith.constant 1.000000e+00 : f32
    %33 = vector.broadcast %cst_18 : f32 to vector<8x128xf32>
    %34 = arith.addf %33, %32 : vector<8x128xf32>
    %35 = arith.divf %33, %34 : vector<8x128xf32>
    %36 = vector.extract_strided_slice %18 {offsets = [0, 256], sizes = [8, 128], strides = [1, 1]} : vector<8x384xf32> to vector<8x128xf32>
    %37 = vector.extract_strided_slice %19 {offsets = [0, 256], sizes = [8, 128], strides = [1, 1]} : vector<8x384xf32> to vector<8x128xf32>
    %38 = arith.addf %37, %13 : vector<8x128xf32>
    %39 = arith.mulf %27, %38 : vector<8x128xf32>
    %40 = arith.addf %36, %39 : vector<8x128xf32>
    %41 = math.tanh %40 : vector<8x128xf32>
    %cst_19 = arith.constant 1.000000e+00 : f32
    %42 = vector.broadcast %cst_19 : f32 to vector<8x128xf32>
    %43 = arith.subf %42, %35 : vector<8x128xf32>
    %44 = arith.mulf %43, %41 : vector<8x128xf32>
    %45 = arith.mulf %35, %14 : vector<8x128xf32>
    %46 = arith.addf %44, %45 : vector<8x128xf32>
    %c1_i32 = arith.constant 1 : i32
    %c8_i32_20 = arith.constant 8 : i32
    %47 = arith.muli %c1_i32, %c8_i32_20 : i32
    %48 = tpu.assume_multiple %47, 8 : i32
    %49 = arith.index_cast %48 : i32 to index
    %c0_21 = arith.constant 0 : index
    %50 = vector.load %arg11[%49, %c0_21] : memref<64x384xf32, #tpu.memory_space<vmem>>, vector<8x384xf32>
    %cst_22 = arith.constant dense<0.000000e+00> : vector<8x384xf32>
    %51 = tpu.matmul %46, %10, %cst_22 {dimension_numbers = #tpu.dot_dimension_numbers<[1], [0], [0], [1], [0, 0, 1, 1], [], []>} : vector<8x128xf32>, vector<128x384xf32>, vector<8x384xf32> -> vector<8x384xf32>
    %52 = vector.extract_strided_slice %50 {offsets = [0, 0], sizes = [8, 128], strides = [1, 1]} : vector<8x384xf32> to vector<8x128xf32>
    %53 = vector.extract_strided_slice %51 {offsets = [0, 0], sizes = [8, 128], strides = [1, 1]} : vector<8x384xf32> to vector<8x128xf32>
    %54 = arith.addf %52, %53 : vector<8x128xf32>
    %55 = arith.negf %54 : vector<8x128xf32>
    %56 = math.exp %55 : vector<8x128xf32>
    %cst_23 = arith.constant 1.000000e+00 : f32
    %57 = vector.broadcast %cst_23 : f32 to vector<8x128xf32>
    %58 = arith.addf %57, %56 : vector<8x128xf32>
    %59 = arith.divf %57, %58 : vector<8x128xf32>
    %60 = vector.extract_strided_slice %50 {offsets = [0, 128], sizes = [8, 128], strides = [1, 1]} : vector<8x384xf32> to vector<8x128xf32>
    %61 = vector.extract_strided_slice %51 {offsets = [0, 128], sizes = [8, 128], strides = [1, 1]} : vector<8x384xf32> to vector<8x128xf32>
    %62 = arith.addf %60, %61 : vector<8x128xf32>
    %63 = arith.negf %62 : vector<8x128xf32>
    %64 = math.exp %63 : vector<8x128xf32>
    %cst_24 = arith.constant 1.000000e+00 : f32
    %65 = vector.broadcast %cst_24 : f32 to vector<8x128xf32>
    %66 = arith.addf %65, %64 : vector<8x128xf32>
    %67 = arith.divf %65, %66 : vector<8x128xf32>
    %68 = vector.extract_strided_slice %50 {offsets = [0, 256], sizes = [8, 128], strides = [1, 1]} : vector<8x384xf32> to vector<8x128xf32>
    %69 = vector.extract_strided_slice %51 {offsets = [0, 256], sizes = [8, 128], strides = [1, 1]} : vector<8x384xf32> to vector<8x128xf32>
    %70 = arith.addf %69, %13 : vector<8x128xf32>
    %71 = arith.mulf %59, %70 : vector<8x128xf32>
    %72 = arith.addf %68, %71 : vector<8x128xf32>
    %73 = math.tanh %72 : vector<8x128xf32>
    %cst_25 = arith.constant 1.000000e+00 : f32
    %74 = vector.broadcast %cst_25 : f32 to vector<8x128xf32>
    %75 = arith.subf %74, %67 : vector<8x128xf32>
    %76 = arith.mulf %75, %73 : vector<8x128xf32>
    %77 = arith.mulf %67, %46 : vector<8x128xf32>
    %78 = arith.addf %76, %77 : vector<8x128xf32>
    %c2_i32 = arith.constant 2 : i32
    %c8_i32_26 = arith.constant 8 : i32
    %79 = arith.muli %c2_i32, %c8_i32_26 : i32
    %80 = tpu.assume_multiple %79, 8 : i32
    %81 = arith.index_cast %80 : i32 to index
    %c0_27 = arith.constant 0 : index
    %82 = vector.load %arg11[%81, %c0_27] : memref<64x384xf32, #tpu.memory_space<vmem>>, vector<8x384xf32>
    %cst_28 = arith.constant dense<0.000000e+00> : vector<8x384xf32>
    %83 = tpu.matmul %78, %10, %cst_28 {dimension_numbers = #tpu.dot_dimension_numbers<[1], [0], [0], [1], [0, 0, 1, 1], [], []>} : vector<8x128xf32>, vector<128x384xf32>, vector<8x384xf32> -> vector<8x384xf32>
    %84 = vector.extract_strided_slice %82 {offsets = [0, 0], sizes = [8, 128], strides = [1, 1]} : vector<8x384xf32> to vector<8x128xf32>
    %85 = vector.extract_strided_slice %83 {offsets = [0, 0], sizes = [8, 128], strides = [1, 1]} : vector<8x384xf32> to vector<8x128xf32>
    %86 = arith.addf %84, %85 : vector<8x128xf32>
    %87 = arith.negf %86 : vector<8x128xf32>
    %88 = math.exp %87 : vector<8x128xf32>
    %cst_29 = arith.constant 1.000000e+00 : f32
    %89 = vector.broadcast %cst_29 : f32 to vector<8x128xf32>
    %90 = arith.addf %89, %88 : vector<8x128xf32>
    %91 = arith.divf %89, %90 : vector<8x128xf32>
    %92 = vector.extract_strided_slice %82 {offsets = [0, 128], sizes = [8, 128], strides = [1, 1]} : vector<8x384xf32> to vector<8x128xf32>
    %93 = vector.extract_strided_slice %83 {offsets = [0, 128], sizes = [8, 128], strides = [1, 1]} : vector<8x384xf32> to vector<8x128xf32>
    %94 = arith.addf %92, %93 : vector<8x128xf32>
    %95 = arith.negf %94 : vector<8x128xf32>
    %96 = math.exp %95 : vector<8x128xf32>
    %cst_30 = arith.constant 1.000000e+00 : f32
    %97 = vector.broadcast %cst_30 : f32 to vector<8x128xf32>
    %98 = arith.addf %97, %96 : vector<8x128xf32>
    %99 = arith.divf %97, %98 : vector<8x128xf32>
    %100 = vector.extract_strided_slice %82 {offsets = [0, 256], sizes = [8, 128], strides = [1, 1]} : vector<8x384xf32> to vector<8x128xf32>
    %101 = vector.extract_strided_slice %83 {offsets = [0, 256], sizes = [8, 128], strides = [1, 1]} : vector<8x384xf32> to vector<8x128xf32>
    %102 = arith.addf %101, %13 : vector<8x128xf32>
    %103 = arith.mulf %91, %102 : vector<8x128xf32>
    %104 = arith.addf %100, %103 : vector<8x128xf32>
    %105 = math.tanh %104 : vector<8x128xf32>
    %cst_31 = arith.constant 1.000000e+00 : f32
    %106 = vector.broadcast %cst_31 : f32 to vector<8x128xf32>
    %107 = arith.subf %106, %99 : vector<8x128xf32>
    %108 = arith.mulf %107, %105 : vector<8x128xf32>
    %109 = arith.mulf %99, %78 : vector<8x128xf32>
    %110 = arith.addf %108, %109 : vector<8x128xf32>
    %c3_i32 = arith.constant 3 : i32
    %c8_i32_32 = arith.constant 8 : i32
    %111 = arith.muli %c3_i32, %c8_i32_32 : i32
    %112 = tpu.assume_multiple %111, 8 : i32
    %113 = arith.index_cast %112 : i32 to index
    %c0_33 = arith.constant 0 : index
    %114 = vector.load %arg11[%113, %c0_33] : memref<64x384xf32, #tpu.memory_space<vmem>>, vector<8x384xf32>
    %cst_34 = arith.constant dense<0.000000e+00> : vector<8x384xf32>
    %115 = tpu.matmul %110, %10, %cst_34 {dimension_numbers = #tpu.dot_dimension_numbers<[1], [0], [0], [1], [0, 0, 1, 1], [], []>} : vector<8x128xf32>, vector<128x384xf32>, vector<8x384xf32> -> vector<8x384xf32>
    %116 = vector.extract_strided_slice %114 {offsets = [0, 0], sizes = [8, 128], strides = [1, 1]} : vector<8x384xf32> to vector<8x128xf32>
    %117 = vector.extract_strided_slice %115 {offsets = [0, 0], sizes = [8, 128], strides = [1, 1]} : vector<8x384xf32> to vector<8x128xf32>
    %118 = arith.addf %116, %117 : vector<8x128xf32>
    %119 = arith.negf %118 : vector<8x128xf32>
    %120 = math.exp %119 : vector<8x128xf32>
    %cst_35 = arith.constant 1.000000e+00 : f32
    %121 = vector.broadcast %cst_35 : f32 to vector<8x128xf32>
    %122 = arith.addf %121, %120 : vector<8x128xf32>
    %123 = arith.divf %121, %122 : vector<8x128xf32>
    %124 = vector.extract_strided_slice %114 {offsets = [0, 128], sizes = [8, 128], strides = [1, 1]} : vector<8x384xf32> to vector<8x128xf32>
    %125 = vector.extract_strided_slice %115 {offsets = [0, 128], sizes = [8, 128], strides = [1, 1]} : vector<8x384xf32> to vector<8x128xf32>
    %126 = arith.addf %124, %125 : vector<8x128xf32>
    %127 = arith.negf %126 : vector<8x128xf32>
    %128 = math.exp %127 : vector<8x128xf32>
    %cst_36 = arith.constant 1.000000e+00 : f32
    %129 = vector.broadcast %cst_36 : f32 to vector<8x128xf32>
    %130 = arith.addf %129, %128 : vector<8x128xf32>
    %131 = arith.divf %129, %130 : vector<8x128xf32>
    %132 = vector.extract_strided_slice %114 {offsets = [0, 256], sizes = [8, 128], strides = [1, 1]} : vector<8x384xf32> to vector<8x128xf32>
    %133 = vector.extract_strided_slice %115 {offsets = [0, 256], sizes = [8, 128], strides = [1, 1]} : vector<8x384xf32> to vector<8x128xf32>
    %134 = arith.addf %133, %13 : vector<8x128xf32>
    %135 = arith.mulf %123, %134 : vector<8x128xf32>
    %136 = arith.addf %132, %135 : vector<8x128xf32>
    %137 = math.tanh %136 : vector<8x128xf32>
    %cst_37 = arith.constant 1.000000e+00 : f32
    %138 = vector.broadcast %cst_37 : f32 to vector<8x128xf32>
    %139 = arith.subf %138, %131 : vector<8x128xf32>
    %140 = arith.mulf %139, %137 : vector<8x128xf32>
    %141 = arith.mulf %131, %110 : vector<8x128xf32>
    %142 = arith.addf %140, %141 : vector<8x128xf32>
    %c4_i32 = arith.constant 4 : i32
    %c8_i32_38 = arith.constant 8 : i32
    %143 = arith.muli %c4_i32, %c8_i32_38 : i32
    %144 = tpu.assume_multiple %143, 8 : i32
    %145 = arith.index_cast %144 : i32 to index
    %c0_39 = arith.constant 0 : index
    %146 = vector.load %arg11[%145, %c0_39] : memref<64x384xf32, #tpu.memory_space<vmem>>, vector<8x384xf32>
    %cst_40 = arith.constant dense<0.000000e+00> : vector<8x384xf32>
    %147 = tpu.matmul %142, %10, %cst_40 {dimension_numbers = #tpu.dot_dimension_numbers<[1], [0], [0], [1], [0, 0, 1, 1], [], []>} : vector<8x128xf32>, vector<128x384xf32>, vector<8x384xf32> -> vector<8x384xf32>
    %148 = vector.extract_strided_slice %146 {offsets = [0, 0], sizes = [8, 128], strides = [1, 1]} : vector<8x384xf32> to vector<8x128xf32>
    %149 = vector.extract_strided_slice %147 {offsets = [0, 0], sizes = [8, 128], strides = [1, 1]} : vector<8x384xf32> to vector<8x128xf32>
    %150 = arith.addf %148, %149 : vector<8x128xf32>
    %151 = arith.negf %150 : vector<8x128xf32>
    %152 = math.exp %151 : vector<8x128xf32>
    %cst_41 = arith.constant 1.000000e+00 : f32
    %153 = vector.broadcast %cst_41 : f32 to vector<8x128xf32>
    %154 = arith.addf %153, %152 : vector<8x128xf32>
    %155 = arith.divf %153, %154 : vector<8x128xf32>
    %156 = vector.extract_strided_slice %146 {offsets = [0, 128], sizes = [8, 128], strides = [1, 1]} : vector<8x384xf32> to vector<8x128xf32>
    %157 = vector.extract_strided_slice %147 {offsets = [0, 128], sizes = [8, 128], strides = [1, 1]} : vector<8x384xf32> to vector<8x128xf32>
    %158 = arith.addf %156, %157 : vector<8x128xf32>
    %159 = arith.negf %158 : vector<8x128xf32>
    %160 = math.exp %159 : vector<8x128xf32>
    %cst_42 = arith.constant 1.000000e+00 : f32
    %161 = vector.broadcast %cst_42 : f32 to vector<8x128xf32>
    %162 = arith.addf %161, %160 : vector<8x128xf32>
    %163 = arith.divf %161, %162 : vector<8x128xf32>
    %164 = vector.extract_strided_slice %146 {offsets = [0, 256], sizes = [8, 128], strides = [1, 1]} : vector<8x384xf32> to vector<8x128xf32>
    %165 = vector.extract_strided_slice %147 {offsets = [0, 256], sizes = [8, 128], strides = [1, 1]} : vector<8x384xf32> to vector<8x128xf32>
    %166 = arith.addf %165, %13 : vector<8x128xf32>
    %167 = arith.mulf %155, %166 : vector<8x128xf32>
    %168 = arith.addf %164, %167 : vector<8x128xf32>
    %169 = math.tanh %168 : vector<8x128xf32>
    %cst_43 = arith.constant 1.000000e+00 : f32
    %170 = vector.broadcast %cst_43 : f32 to vector<8x128xf32>
    %171 = arith.subf %170, %163 : vector<8x128xf32>
    %172 = arith.mulf %171, %169 : vector<8x128xf32>
    %173 = arith.mulf %163, %142 : vector<8x128xf32>
    %174 = arith.addf %172, %173 : vector<8x128xf32>
    %c5_i32 = arith.constant 5 : i32
    %c8_i32_44 = arith.constant 8 : i32
    %175 = arith.muli %c5_i32, %c8_i32_44 : i32
    %176 = tpu.assume_multiple %175, 8 : i32
    %177 = arith.index_cast %176 : i32 to index
    %c0_45 = arith.constant 0 : index
    %178 = vector.load %arg11[%177, %c0_45] : memref<64x384xf32, #tpu.memory_space<vmem>>, vector<8x384xf32>
    %cst_46 = arith.constant dense<0.000000e+00> : vector<8x384xf32>
    %179 = tpu.matmul %174, %10, %cst_46 {dimension_numbers = #tpu.dot_dimension_numbers<[1], [0], [0], [1], [0, 0, 1, 1], [], []>} : vector<8x128xf32>, vector<128x384xf32>, vector<8x384xf32> -> vector<8x384xf32>
    %180 = vector.extract_strided_slice %178 {offsets = [0, 0], sizes = [8, 128], strides = [1, 1]} : vector<8x384xf32> to vector<8x128xf32>
    %181 = vector.extract_strided_slice %179 {offsets = [0, 0], sizes = [8, 128], strides = [1, 1]} : vector<8x384xf32> to vector<8x128xf32>
    %182 = arith.addf %180, %181 : vector<8x128xf32>
    %183 = arith.negf %182 : vector<8x128xf32>
    %184 = math.exp %183 : vector<8x128xf32>
    %cst_47 = arith.constant 1.000000e+00 : f32
    %185 = vector.broadcast %cst_47 : f32 to vector<8x128xf32>
    %186 = arith.addf %185, %184 : vector<8x128xf32>
    %187 = arith.divf %185, %186 : vector<8x128xf32>
    %188 = vector.extract_strided_slice %178 {offsets = [0, 128], sizes = [8, 128], strides = [1, 1]} : vector<8x384xf32> to vector<8x128xf32>
    %189 = vector.extract_strided_slice %179 {offsets = [0, 128], sizes = [8, 128], strides = [1, 1]} : vector<8x384xf32> to vector<8x128xf32>
    %190 = arith.addf %188, %189 : vector<8x128xf32>
    %191 = arith.negf %190 : vector<8x128xf32>
    %192 = math.exp %191 : vector<8x128xf32>
    %cst_48 = arith.constant 1.000000e+00 : f32
    %193 = vector.broadcast %cst_48 : f32 to vector<8x128xf32>
    %194 = arith.addf %193, %192 : vector<8x128xf32>
    %195 = arith.divf %193, %194 : vector<8x128xf32>
    %196 = vector.extract_strided_slice %178 {offsets = [0, 256], sizes = [8, 128], strides = [1, 1]} : vector<8x384xf32> to vector<8x128xf32>
    %197 = vector.extract_strided_slice %179 {offsets = [0, 256], sizes = [8, 128], strides = [1, 1]} : vector<8x384xf32> to vector<8x128xf32>
    %198 = arith.addf %197, %13 : vector<8x128xf32>
    %199 = arith.mulf %187, %198 : vector<8x128xf32>
    %200 = arith.addf %196, %199 : vector<8x128xf32>
    %201 = math.tanh %200 : vector<8x128xf32>
    %cst_49 = arith.constant 1.000000e+00 : f32
    %202 = vector.broadcast %cst_49 : f32 to vector<8x128xf32>
    %203 = arith.subf %202, %195 : vector<8x128xf32>
    %204 = arith.mulf %203, %201 : vector<8x128xf32>
    %205 = arith.mulf %195, %174 : vector<8x128xf32>
    %206 = arith.addf %204, %205 : vector<8x128xf32>
    %c6_i32 = arith.constant 6 : i32
    %c8_i32_50 = arith.constant 8 : i32
    %207 = arith.muli %c6_i32, %c8_i32_50 : i32
    %208 = tpu.assume_multiple %207, 8 : i32
    %209 = arith.index_cast %208 : i32 to index
    %c0_51 = arith.constant 0 : index
    %210 = vector.load %arg11[%209, %c0_51] : memref<64x384xf32, #tpu.memory_space<vmem>>, vector<8x384xf32>
    %cst_52 = arith.constant dense<0.000000e+00> : vector<8x384xf32>
    %211 = tpu.matmul %206, %10, %cst_52 {dimension_numbers = #tpu.dot_dimension_numbers<[1], [0], [0], [1], [0, 0, 1, 1], [], []>} : vector<8x128xf32>, vector<128x384xf32>, vector<8x384xf32> -> vector<8x384xf32>
    %212 = vector.extract_strided_slice %210 {offsets = [0, 0], sizes = [8, 128], strides = [1, 1]} : vector<8x384xf32> to vector<8x128xf32>
    %213 = vector.extract_strided_slice %211 {offsets = [0, 0], sizes = [8, 128], strides = [1, 1]} : vector<8x384xf32> to vector<8x128xf32>
    %214 = arith.addf %212, %213 : vector<8x128xf32>
    %215 = arith.negf %214 : vector<8x128xf32>
    %216 = math.exp %215 : vector<8x128xf32>
    %cst_53 = arith.constant 1.000000e+00 : f32
    %217 = vector.broadcast %cst_53 : f32 to vector<8x128xf32>
    %218 = arith.addf %217, %216 : vector<8x128xf32>
    %219 = arith.divf %217, %218 : vector<8x128xf32>
    %220 = vector.extract_strided_slice %210 {offsets = [0, 128], sizes = [8, 128], strides = [1, 1]} : vector<8x384xf32> to vector<8x128xf32>
    %221 = vector.extract_strided_slice %211 {offsets = [0, 128], sizes = [8, 128], strides = [1, 1]} : vector<8x384xf32> to vector<8x128xf32>
    %222 = arith.addf %220, %221 : vector<8x128xf32>
    %223 = arith.negf %222 : vector<8x128xf32>
    %224 = math.exp %223 : vector<8x128xf32>
    %cst_54 = arith.constant 1.000000e+00 : f32
    %225 = vector.broadcast %cst_54 : f32 to vector<8x128xf32>
    %226 = arith.addf %225, %224 : vector<8x128xf32>
    %227 = arith.divf %225, %226 : vector<8x128xf32>
    %228 = vector.extract_strided_slice %210 {offsets = [0, 256], sizes = [8, 128], strides = [1, 1]} : vector<8x384xf32> to vector<8x128xf32>
    %229 = vector.extract_strided_slice %211 {offsets = [0, 256], sizes = [8, 128], strides = [1, 1]} : vector<8x384xf32> to vector<8x128xf32>
    %230 = arith.addf %229, %13 : vector<8x128xf32>
    %231 = arith.mulf %219, %230 : vector<8x128xf32>
    %232 = arith.addf %228, %231 : vector<8x128xf32>
    %233 = math.tanh %232 : vector<8x128xf32>
    %cst_55 = arith.constant 1.000000e+00 : f32
    %234 = vector.broadcast %cst_55 : f32 to vector<8x128xf32>
    %235 = arith.subf %234, %227 : vector<8x128xf32>
    %236 = arith.mulf %235, %233 : vector<8x128xf32>
    %237 = arith.mulf %227, %206 : vector<8x128xf32>
    %238 = arith.addf %236, %237 : vector<8x128xf32>
    %c7_i32 = arith.constant 7 : i32
    %c8_i32_56 = arith.constant 8 : i32
    %239 = arith.muli %c7_i32, %c8_i32_56 : i32
    %240 = tpu.assume_multiple %239, 8 : i32
    %241 = arith.index_cast %240 : i32 to index
    %c0_57 = arith.constant 0 : index
    %242 = vector.load %arg11[%241, %c0_57] : memref<64x384xf32, #tpu.memory_space<vmem>>, vector<8x384xf32>
    %cst_58 = arith.constant dense<0.000000e+00> : vector<8x384xf32>
    %243 = tpu.matmul %238, %10, %cst_58 {dimension_numbers = #tpu.dot_dimension_numbers<[1], [0], [0], [1], [0, 0, 1, 1], [], []>} : vector<8x128xf32>, vector<128x384xf32>, vector<8x384xf32> -> vector<8x384xf32>
    %244 = vector.extract_strided_slice %242 {offsets = [0, 0], sizes = [8, 128], strides = [1, 1]} : vector<8x384xf32> to vector<8x128xf32>
    %245 = vector.extract_strided_slice %243 {offsets = [0, 0], sizes = [8, 128], strides = [1, 1]} : vector<8x384xf32> to vector<8x128xf32>
    %246 = arith.addf %244, %245 : vector<8x128xf32>
    %247 = arith.negf %246 : vector<8x128xf32>
    %248 = math.exp %247 : vector<8x128xf32>
    %cst_59 = arith.constant 1.000000e+00 : f32
    %249 = vector.broadcast %cst_59 : f32 to vector<8x128xf32>
    %250 = arith.addf %249, %248 : vector<8x128xf32>
    %251 = arith.divf %249, %250 : vector<8x128xf32>
    %252 = vector.extract_strided_slice %242 {offsets = [0, 128], sizes = [8, 128], strides = [1, 1]} : vector<8x384xf32> to vector<8x128xf32>
    %253 = vector.extract_strided_slice %243 {offsets = [0, 128], sizes = [8, 128], strides = [1, 1]} : vector<8x384xf32> to vector<8x128xf32>
    %254 = arith.addf %252, %253 : vector<8x128xf32>
    %255 = arith.negf %254 : vector<8x128xf32>
    %256 = math.exp %255 : vector<8x128xf32>
    %cst_60 = arith.constant 1.000000e+00 : f32
    %257 = vector.broadcast %cst_60 : f32 to vector<8x128xf32>
    %258 = arith.addf %257, %256 : vector<8x128xf32>
    %259 = arith.divf %257, %258 : vector<8x128xf32>
    %260 = vector.extract_strided_slice %242 {offsets = [0, 256], sizes = [8, 128], strides = [1, 1]} : vector<8x384xf32> to vector<8x128xf32>
    %261 = vector.extract_strided_slice %243 {offsets = [0, 256], sizes = [8, 128], strides = [1, 1]} : vector<8x384xf32> to vector<8x128xf32>
    %262 = arith.addf %261, %13 : vector<8x128xf32>
    %263 = arith.mulf %251, %262 : vector<8x128xf32>
    %264 = arith.addf %260, %263 : vector<8x128xf32>
    %265 = math.tanh %264 : vector<8x128xf32>
    %cst_61 = arith.constant 1.000000e+00 : f32
    %266 = vector.broadcast %cst_61 : f32 to vector<8x128xf32>
    %267 = arith.subf %266, %259 : vector<8x128xf32>
    %268 = arith.mulf %267, %265 : vector<8x128xf32>
    %269 = arith.mulf %259, %238 : vector<8x128xf32>
    %270 = arith.addf %268, %269 : vector<8x128xf32>
    %c8_i32_62 = arith.constant 8 : i32
    %c0_63 = arith.constant 0 : index
    %c0_64 = arith.constant 0 : index
    %271 = vector.load %arg10[%c0_63, %c0_64] : memref<8x128xf32, #tpu.memory_space<vmem>>, vector<8x128xf32>
    tpu.vector_store %arg10[%c0_63, %c0_64], %270 {strides = array<i32>} : memref<8x128xf32, #tpu.memory_space<vmem>>, vector<8x128xf32>,
    %c0_i32_65 = arith.constant 0 : i32
    %272 = arith.cmpi eq, %arg1, %c0_i32_65 : i32
    %273 = arith.extui %272 : i1 to i32
    %c0_i32_66 = arith.constant 0 : i32
    %274 = arith.cmpi ne, %273, %c0_i32_66 : i32
    scf.if %274 {
      %c0_67 = arith.constant 0 : index
      %c0_68 = arith.constant 0 : index
      %275 = vector.load %arg10[%c0_67, %c0_68] : memref<8x128xf32, #tpu.memory_space<vmem>>, vector<8x128xf32>
      %c0_69 = arith.constant 0 : index
      %c0_70 = arith.constant 0 : index
      %276 = vector.load %arg7[%c0_69, %c0_70] : memref<128x128xf32, #tpu.memory_space<vmem>>, vector<128x128xf32>
      %cst_71 = arith.constant dense<0.000000e+00> : vector<8x128xf32>
      %277 = tpu.matmul %275, %276, %cst_71 {dimension_numbers = #tpu.dot_dimension_numbers<[1], [0], [0], [1], [0, 0, 1, 1], [], []>} : vector<8x128xf32>, vector<128x128xf32>, vector<8x128xf32> -> vector<8x128xf32>
      %c0_72 = arith.constant 0 : index
      %c0_73 = arith.constant 0 : index
      %278 = vector.load %arg8[%c0_72, %c0_73] : memref<1x128xf32, #tpu.memory_space<vmem>>, vector<1x128xf32>
      %279 = vector.broadcast %278 : vector<1x128xf32> to vector<8x128xf32>
      %280 = arith.addf %277, %279 : vector<8x128xf32>
      %c0_74 = arith.constant 0 : index
      %c0_75 = arith.constant 0 : index
      %281 = vector.load %arg9[%c0_74, %c0_75] : memref<8x128xf32, #tpu.memory_space<vmem>>, vector<8x128xf32>
      tpu.vector_store %arg9[%c0_74, %c0_75], %280 {strides = array<i32>} : memref<8x128xf32, #tpu.memory_space<vmem>>, vector<8x128xf32>,
    } else {
    }
    return
  }
  func.func @transform_0(%arg0: i32, %arg1: i32) -> (i32, i32) {
    %c1_i32 = arith.constant 1 : i32
    %0 = arith.muli %arg0, %c1_i32 : i32
    %1 = arith.addi %0, %arg1 : i32
    %c0_i32 = arith.constant 0 : i32
    %c0_i32_0 = arith.constant 0 : i32
    return %1, %c0_i32 : i32, i32
  }
  func.func @transform_1(%arg0: i32, %arg1: i32) -> (i32, i32) {
    %c0_i32 = arith.constant 0 : i32
    %c0_i32_0 = arith.constant 0 : i32
    %c0_i32_1 = arith.constant 0 : i32
    return %c0_i32, %c0_i32_0 : i32, i32
  }
  func.func @transform_2(%arg0: i32, %arg1: i32) -> (i32, i32) {
    %c0_i32 = arith.constant 0 : i32
    %c0_i32_0 = arith.constant 0 : i32
    %c0_i32_1 = arith.constant 0 : i32
    return %c0_i32, %c0_i32_0 : i32, i32
  }
  func.func @transform_3(%arg0: i32, %arg1: i32) -> (i32, i32) {
    %c0_i32 = arith.constant 0 : i32
    %c0_i32_0 = arith.constant 0 : i32
    %c0_i32_1 = arith.constant 0 : i32
    return %c0_i32, %c0_i32_0 : i32, i32
  }
  func.func @transform_4(%arg0: i32, %arg1: i32) -> (i32, i32) {
    %c0_i32 = arith.constant 0 : i32
    %c0_i32_0 = arith.constant 0 : i32
    %c0_i32_1 = arith.constant 0 : i32
    return %c0_i32, %c0_i32_0 : i32, i32
  }
  func.func @transform_5(%arg0: i32, %arg1: i32) -> (i32, i32) {
    %c0_i32 = arith.constant 0 : i32
    %c0_i32_0 = arith.constant 0 : i32
    %c0_i32_1 = arith.constant 0 : i32
    return %c0_i32, %c0_i32_0 : i32, i32
  }
  func.func @transform_6(%arg0: i32, %arg1: i32) -> (i32, i32) {
    %c0_i32 = arith.constant 0 : i32
    %c0_i32_0 = arith.constant 0 : i32
    %c0_i32_1 = arith.constant 0 : i32
    return %c0_i32, %c0_i32_0 : i32, i32
  }
  func.func @transform_7(%arg0: i32, %arg1: i32) -> (i32, i32) {
    %c0_i32 = arith.constant 0 : i32
    %c0_i32_0 = arith.constant 0 : i32
    return %arg0, %c0_i32 : i32, i32
  }
}

</mosaic_0001>

<llo_original>
// kernel: tpu_custom_call.1
$region0: #{tpu_custom_call.1}
  #allocation0 [shape = 'u32[]', space=smem, size = 0x4, offset = 0x4, fixed_abs, tag = 'smem constant byte address 0x4 - core index']
  #allocation1 [shape = 'u32[144,128]{1,0:T(1,128)}', space=vmem, size = 0x12000, scoped, tag = 'internal scratch']
  #allocation2 [shape = 'f32[8,128]{1,0:T(8,128)}', space=vmem, size = 0x1000, scoped, tag = 'scratch operand']
  #allocation3 [shape = 'f32[64,384]{1,0:T(8,128)}', space=vmem, size = 0x18000, scoped, tag = 'scratch operand']
  %s0 = inlined_call_operand.vmem [shape: f32[64,16], index: 0, kind: input, shape index: {}]
  %s1 = inlined_call_operand.vmem [shape: f32[16,384], index: 1, kind: input, shape index: {}]
  %s2 = inlined_call_operand.vmem [shape: f32[1,384], index: 2, kind: input, shape index: {}]
  %s3 = inlined_call_operand.hbm [shape: f32[128,384], index: 3, kind: input, shape index: {}]
  %s4 = inlined_call_operand.vmem [shape: f32[1,128], index: 4, kind: input, shape index: {}]
  %s5 = inlined_call_operand.hbm [shape: f32[128,128], index: 5, kind: input, shape index: {}]
  %s6 = inlined_call_operand.vmem [shape: f32[1,128], index: 6, kind: input, shape index: {}]
  %s7 = inlined_call_operand.hbm [shape: f32[8,128], index: 7, kind: output, shape index: {}]
  %s8 = sld [smem:[#allocation0]]
  $region54: #{tpu_custom_call.1} parent=0
    _
  %s10 = ssub.s32 1, %s8
  %s11 = scalar_select 0, %s10, %s8
  $region1: #{tpu_custom_call.1} parent=0
    #allocation4 [shape = 'u8[196608]{0}', space=vmem, size = 0x30000, scoped, tag = 'input window, operand 3, single buffered']
    #allocation5 [shape = 's32[1]{0}', space=sflag, size = 0x4, scoped, tag = 'scoped memory for tpu_custom_call.1']
    #allocation6 [shape = 's32[1]{0}', space=sflag, size = 0x4, scoped, tag = 'scoped memory for tpu_custom_call.1']
    #allocation7 [shape = 'u8[65536]{0}', space=vmem, size = 0x10000, scoped, tag = 'input window, operand 5, single buffered']
    #allocation8 [shape = 's32[1]{0}', space=sflag, size = 0x4, scoped, tag = 'scoped memory for tpu_custom_call.1']
    #allocation9 [shape = 'u8[4096]{0}', space=vmem, size = 0x1000, scoped, tag = 'output window, operand 0, single buffered']
    %12 = vsyncpa [#allocation5], 0
    %13 = vsyncpa [#allocation8], 0
    %14 = vsyncpa [#allocation6], 0
    // Predicated region
    $region2: #{tpu_custom_call.1} parent=1 // pred_check
      _
    $region3: #{tpu_custom_call.1} parent=1 // pred_check_branch
      %16 = sbr.rel (0) target = $region5
    $region4: #{tpu_custom_call.1} parent=1 // pred_region
      %s17 = sadd.s32 0, 0
      %s18 = smul.u32 8, %s17
      %p19 = scmp.lt.s32.totalorder %s18, 7
      %s20 = scalar_select %p19, %s18, 7
      %s21 = smul.addr %s20, 8
      %s22 = scalar_lea.vmem %s0, %s21
      %s23 = sadd.s32 0, 0
      %s24 = smul.u32 8, %s23
    $region5: #{tpu_custom_call.1} parent=1 // pred_fallthru
      _
    // Predicated region
    $region6: #{tpu_custom_call.1} parent=1 // pred_check
      _
    $region7: #{tpu_custom_call.1} parent=1 // pred_check_branch
      %26 = sbr.rel (0) target = $region9
    $region8: #{tpu_custom_call.1} parent=1 // pred_region
      _
    $region9: #{tpu_custom_call.1} parent=1 // pred_fallthru
      _
    // Predicated region
    $region10: #{tpu_custom_call.1} parent=1 // pred_check
      _
    $region11: #{tpu_custom_call.1} parent=1 // pred_check_branch
      %28 = sbr.rel (0) target = $region13
    $region12: #{tpu_custom_call.1} parent=1 // pred_region
      _
    $region13: #{tpu_custom_call.1} parent=1 // pred_fallthru
      _
    // Predicated region
    $region14: #{tpu_custom_call.1} parent=1 // pred_check
      _
    $region15: #{tpu_custom_call.1} parent=1 // pred_check_branch
      %30 = sbr.rel (0) target = $region17
    $region16: #{tpu_custom_call.1} parent=1 // pred_region
      %s32 = ssub.s32 6144, 6144
      %33 = vsyncadd [#allocation5], %s32
      %s34 = sshll.u32 [#allocation4], 4
      %s35 = int_to_ptr.vmem [resolvable:$true] %s34
      %40 = dma.hbm_to_vmem [thread:$0]  %s3, 6144, %s35, [#allocation5], 384, 384, 24
    $region17: #{tpu_custom_call.1} parent=1 // pred_fallthru
      _
    // Predicated region
    $region18: #{tpu_custom_call.1} parent=1 // pred_check
      _
    $region19: #{tpu_custom_call.1} parent=1 // pred_check_branch
      %42 = sbr.rel (0) target = $region21
    $region20: #{tpu_custom_call.1} parent=1 // pred_region
      _
    $region21: #{tpu_custom_call.1} parent=1 // pred_fallthru
      _
    // Predicated region
    $region22: #{tpu_custom_call.1} parent=1 // pred_check
      _
    $region23: #{tpu_custom_call.1} parent=1 // pred_check_branch
      %44 = sbr.rel (0) target = $region25
    $region24: #{tpu_custom_call.1} parent=1 // pred_region
      %s46 = ssub.s32 2048, 2048
      %47 = vsyncadd [#allocation8], %s46
      %s48 = sshll.u32 [#allocation7], 4
      %s49 = int_to_ptr.vmem [resolvable:$true] %s48
      %54 = dma.hbm_to_vmem [thread:$0]  %s5, 2048, %s49, [#allocation8], 128, 128, 8
    $region25: #{tpu_custom_call.1} parent=1 // pred_fallthru
      _
    // Predicated region
    $region26: #{tpu_custom_call.1} parent=1 // pred_check
      _
    $region27: #{tpu_custom_call.1} parent=1 // pred_check_branch
      %56 = sbr.rel (0) target = $region29
    $region28: #{tpu_custom_call.1} parent=1 // pred_region
      _
    $region29: #{tpu_custom_call.1} parent=1 // pred_fallthru
      _
    // Predicated region
    $region30: #{tpu_custom_call.1} parent=1 // pred_check
      _
    $region31: #{tpu_custom_call.1} parent=1 // pred_check_branch
      %58 = sbr.rel (0) target = $region33
    $region32: #{tpu_custom_call.1} parent=1 // pred_region
      %59 = dma.done [#allocation5], 6144
    $region33: #{tpu_custom_call.1} parent=1 // pred_fallthru
      _
    // Predicated region
    $region34: #{tpu_custom_call.1} parent=1 // pred_check
      _
    $region35: #{tpu_custom_call.1} parent=1 // pred_check_branch
      %61 = sbr.rel (0) target = $region37
    $region36: #{tpu_custom_call.1} parent=1 // pred_region
      %62 = dma.done [#allocation8], 2048
    $region37: #{tpu_custom_call.1} parent=1 // pred_fallthru
      _
    %s63 = sadd.s32 0, 0
    %s64 = smul.u32 8, %s63
    %p65 = scmp.lt.s32.totalorder %s64, 7
    %s66 = scalar_select %p65, %s64, 7
    %s67 = smul.addr %s66, 8
    %s68 = scalar_lea.vmem %s0, %s67
    %s69 = sadd.s32 0, 0
    %s70 = smul.u32 8, %s69
    %p71 = scmp.lt.s32.totalorder %s70, 7
    %s72 = scalar_select %p71, %s70, 7
    %s73 = smul.addr %s72, 8
    %s74 = scalar_lea.vmem %s0, %s73
    %s75 = sadd.s32 0, 0
    %s76 = smul.u32 8, %s75
    %p77 = scmp.eq.s32.totalorder 0, 0
    // Predicated region
    $region38: #{tpu_custom_call.1} parent=1 // pred_check
      %p78 = pneg %p77
    $region39: #{tpu_custom_call.1} parent=1 // pred_check_branch
      %80 = sbr.rel (%p78) target = $region41
    $region40: #{tpu_custom_call.1} parent=1 // pred_region
      %81 = vst [vmem:[#allocation2] sm:$0xff] 0.0
    $region41: #{tpu_custom_call.1} parent=1 // pred_fallthru
      _
    %v82 = vld [vmem:[%s74] sm:$0xff]
    %v83 = vld [vmem:[%s74 + $0x8] sm:$0xff]
    %v84 = vld [vmem:[%s74 + $0x10] sm:$0xff]
    %v85 = vld [vmem:[%s74 + $0x18] sm:$0xff]
    %v86 = vld [vmem:[%s74 + $0x20] sm:$0xff]
    %v87 = vld [vmem:[%s74 + $0x28] sm:$0xff]
    %v88 = vld [vmem:[%s74 + $0x30] sm:$0xff]
    %v89 = vld [vmem:[%s74 + $0x38] sm:$0xff]
    %v90 = vld [vmem:[%s1] sm:$0xff]
    %v91 = vld [vmem:[%s1 + $0x8] sm:$0xff]
    %v92 = vld [vmem:[%s1 + $0x10] sm:$0xff]
    %v93 = vld [vmem:[%s1 + $0x18] sm:$0xff]
    %v94 = vld [vmem:[%s1 + $0x20] sm:$0xff]
    %v95 = vld [vmem:[%s1 + $0x28] sm:$0xff]
    %v96 = vld [vmem:[%s2] sm:$0x7]
    %v98 = vlaneseq
    %v99 = vshrl.u32 %v98, 7
    %v100 = vsub.s32 0, %v99
    %v101 = vrot.slane %v96, %v100
    %v102 = vlaneseq
    %v103 = vshrl.u32 %v102, 7
    %v104 = vsub.s32 1, %v103
    %v105 = vrot.slane %v96, %v104
    %v106 = vlaneseq
    %v107 = vshrl.u32 %v106, 7
    %v108 = vsub.s32 2, %v107
    %v109 = vrot.slane %v96, %v108
    %vm113 = vcmask 130048
    %v115 = vsel %vm113, %v82, 0
    %v118 = vsel %vm113, %v83, 0
    %v121 = vsel %vm113, %v84, 0
    %v124 = vsel %vm113, %v85, 0
    %v127 = vsel %vm113, %v86, 0
    %v130 = vsel %vm113, %v87, 0
    %v133 = vsel %vm113, %v88, 0
    %v136 = vsel %vm113, %v89, 0
    %138 = vmatprep.subr.mxu0 %v91
    %139 = vmatpush1.msra.mxu0 %v90
    %140 = vmatprep.subr.mxu0 %v94
    %141 = vmatpush1.msra.mxu0 %v93
    %142 = vmatprep.subr.mxu0 0.0
    %143 = vmatpush1.msra.mxu0 0.0
    %144 = vmatprep.subr.mxu0 0.0
    %145 = vmatpush1.msra.mxu0 0.0
    %146 = vmatprep.subr.mxu0 0.0
    %147 = vmatpush1.msra.mxu0 0.0
    %148 = vmatprep.subr.mxu0 0.0
    %149 = vmatpush1.msra.mxu0 0.0
    %150 = vmatprep.subr.mxu0 0.0
    %151 = vmatpush1.msra.mxu0 0.0
    %152 = vmatprep.subr.mxu0 0.0
    %153 = vmatpush1.msra.mxu0 0.0
    %154 = vmatprep.subr.mxu0 0.0
    %155 = vmatpush1.msra.mxu0 0.0
    %156 = vmatprep.subr.mxu0 0.0
    %157 = vmatpush1.msra.mxu0 0.0
    %158 = vmatprep.subr.mxu0 0.0
    %159 = vmatpush1.msra.mxu0 0.0
    %160 = vmatprep.subr.mxu0 0.0
    %161 = vmatpush1.msra.mxu0 0.0
    %162 = vmatprep.subr.mxu0 0.0
    %163 = vmatpush1.msra.mxu0 0.0
    %164 = vmatprep.subr.mxu0 0.0
    %165 = vmatpush1.msra.mxu0 0.0
    %166 = vmatprep.subr.mxu0 0.0
    %167 = vmatpush1.msra.mxu0 0.0
    %168 = vmatprep.subr.mxu0 0.0
    %169 = vmatpush1.msra.mxu0 0.0
    %170 = vmatprep.subr.mxu0 0.0
    %171 = vmatpush1.msra.mxu0 0.0
    %172 = vmatprep.subr.mxu0 0.0
    %173 = vmatpush1.msra.mxu0 0.0
    %174 = vmatprep.subr.mxu0 0.0
    %175 = vmatpush1.msra.mxu0 0.0
    %176 = vmatprep.subr.mxu0 0.0
    %177 = vmatpush1.msra.mxu0 0.0
    %178 = vmatprep.subr.mxu0 0.0
    %179 = vmatpush1.msra.mxu0 0.0
    %180 = vmatprep.subr.mxu0 0.0
    %181 = vmatpush1.msra.mxu0 0.0
    %182 = vmatprep.subr.mxu0 0.0
    %183 = vmatpush1.msra.mxu0 0.0
    %184 = vmatprep.subr.mxu0 0.0
    %185 = vmatpush1.msra.mxu0 0.0
    %186 = vmatprep.subr.mxu0 0.0
    %187 = vmatpush1.msra.mxu0 0.0
    %188 = vmatprep.subr.mxu0 0.0
    %189 = vmatpush1.msra.mxu0 0.0
    %190 = vmatprep.subr.mxu0 0.0
    %191 = vmatpush1.msra.mxu0 0.0
    %192 = vmatprep.subr.mxu0 0.0
    %193 = vmatpush1.msra.mxu0 0.0
    %194 = vmatprep.subr.mxu0 0.0
    %195 = vmatpush1.msra.mxu0 0.0
    %196 = vmatprep.subr.mxu0 0.0
    %197 = vmatpush1.msra.mxu0 0.0
    %198 = vmatprep.subr.mxu0 0.0
    %199 = vmatpush1.msra.mxu0 0.0
    %200 = vmatprep.subr.mxu0 0.0
    %201 = vmatpush1.msra.mxu0 0.0
    %202 = vmatprep.mubr.f32.mxu0 0.0
    %203 = vmatmul.mubr.f32.gmra.mrb[0].mxu0 %v115
    %v204 = vpop.f32.mrb[0].mxu0
    %v205 = vadd.f32 %v101, %v204
    %v206 = vpop.f32.mrb[0].mxu0
    %v207 = vadd.f32 %v105, %v206
    %208 = vmatprep.mubr.f32.mxu0 0.0
    %209 = vmatmul.mubr.f32.gmra.mrb[0].mxu0 %v118
    %v210 = vpop.f32.mrb[0].mxu0
    %v211 = vadd.f32 %v101, %v210
    %v212 = vpop.f32.mrb[0].mxu0
    %v213 = vadd.f32 %v105, %v212
    %214 = vmatprep.mubr.f32.mxu0 0.0
    %215 = vmatmul.mubr.f32.gmra.mrb[0].mxu0 %v121
    %v216 = vpop.f32.mrb[0].mxu0
    %v217 = vadd.f32 %v101, %v216
    %v218 = vpop.f32.mrb[0].mxu0
    %v219 = vadd.f32 %v105, %v218
    %220 = vmatprep.mubr.f32.mxu0 0.0
    %221 = vmatmul.mubr.f32.gmra.mrb[0].mxu0 %v124
    %v222 = vpop.f32.mrb[0].mxu0
    %v223 = vadd.f32 %v101, %v222
    %v224 = vpop.f32.mrb[0].mxu0
    %v225 = vadd.f32 %v105, %v224
    %226 = vmatprep.mubr.f32.mxu0 0.0
    %227 = vmatmul.mubr.f32.gmra.mrb[0].mxu0 %v127
    %v228 = vpop.f32.mrb[0].mxu0
    %v229 = vadd.f32 %v101, %v228
    %v230 = vpop.f32.mrb[0].mxu0
    %v231 = vadd.f32 %v105, %v230
    %232 = vmatprep.mubr.f32.mxu0 0.0
    %233 = vmatmul.mubr.f32.gmra.mrb[0].mxu0 %v130
    %v234 = vpop.f32.mrb[0].mxu0
    %v235 = vadd.f32 %v101, %v234
    %v236 = vpop.f32.mrb[0].mxu0
    %v237 = vadd.f32 %v105, %v236
    %238 = vmatprep.mubr.f32.mxu0 0.0
    %239 = vmatmul.mubr.f32.gmra.mrb[0].mxu0 %v133
    %v240 = vpop.f32.mrb[0].mxu0
    %v241 = vadd.f32 %v101, %v240
    %v242 = vpop.f32.mrb[0].mxu0
    %v243 = vadd.f32 %v105, %v242
    %244 = vmatprep.mubr.f32.mxu0 0.0
    %245 = vmatmul.mubr.f32.gmra.mrb[0].mxu0 %v136
    %v246 = vpop.f32.mrb[0].mxu0
    %v247 = vadd.f32 %v101, %v246
    %v248 = vpop.f32.mrb[0].mxu0
    %v249 = vadd.f32 %v105, %v248
    %250 = vdwg.mxu0
    %251 = vmatprep.subr.mxu0 0.0
    %252 = vmatpush1.msra.mxu0 %v92
    %253 = vmatprep.subr.mxu0 0.0
    %254 = vmatpush1.msra.mxu0 %v95
    %255 = vmatprep.subr.mxu0 0.0
    %256 = vmatpush1.msra.mxu0 0.0
    %257 = vmatprep.subr.mxu0 0.0
    %258 = vmatpush1.msra.mxu0 0.0
    %259 = vmatprep.subr.mxu0 0.0
    %260 = vmatpush1.msra.mxu0 0.0
    %261 = vmatprep.subr.mxu0 0.0
    %262 = vmatpush1.msra.mxu0 0.0
    %263 = vmatprep.subr.mxu0 0.0
    %264 = vmatpush1.msra.mxu0 0.0
    %265 = vmatprep.subr.mxu0 0.0
    %266 = vmatpush1.msra.mxu0 0.0
    %267 = vmatprep.subr.mxu0 0.0
    %268 = vmatpush1.msra.mxu0 0.0
    %269 = vmatprep.subr.mxu0 0.0
    %270 = vmatpush1.msra.mxu0 0.0
    %271 = vmatprep.subr.mxu0 0.0
    %272 = vmatpush1.msra.mxu0 0.0
    %273 = vmatprep.subr.mxu0 0.0
    %274 = vmatpush1.msra.mxu0 0.0
    %275 = vmatprep.subr.mxu0 0.0
    %276 = vmatpush1.msra.mxu0 0.0
    %277 = vmatprep.subr.mxu0 0.0
    %278 = vmatpush1.msra.mxu0 0.0
    %279 = vmatprep.subr.mxu0 0.0
    %280 = vmatpush1.msra.mxu0 0.0
    %281 = vmatprep.subr.mxu0 0.0
    %282 = vmatpush1.msra.mxu0 0.0
    %283 = vmatprep.subr.mxu0 0.0
    %284 = vmatpush1.msra.mxu0 0.0
    %285 = vmatprep.subr.mxu0 0.0
    %286 = vmatpush1.msra.mxu0 0.0
    %287 = vmatprep.subr.mxu0 0.0
    %288 = vmatpush1.msra.mxu0 0.0
    %289 = vmatprep.subr.mxu0 0.0
    %290 = vmatpush1.msra.mxu0 0.0
    %291 = vmatprep.subr.mxu0 0.0
    %292 = vmatpush1.msra.mxu0 0.0
    %293 = vmatprep.subr.mxu0 0.0
    %294 = vmatpush1.msra.mxu0 0.0
    %295 = vmatprep.subr.mxu0 0.0
    %296 = vmatpush1.msra.mxu0 0.0
    %297 = vmatprep.subr.mxu0 0.0
    %298 = vmatpush1.msra.mxu0 0.0
    %299 = vmatprep.subr.mxu0 0.0
    %300 = vmatpush1.msra.mxu0 0.0
    %301 = vmatprep.subr.mxu0 0.0
    %302 = vmatpush1.msra.mxu0 0.0
    %303 = vmatprep.subr.mxu0 0.0
    %304 = vmatpush1.msra.mxu0 0.0
    %305 = vmatprep.subr.mxu0 0.0
    %306 = vmatpush1.msra.mxu0 0.0
    %307 = vmatprep.subr.mxu0 0.0
    %308 = vmatpush1.msra.mxu0 0.0
    %309 = vmatprep.subr.mxu0 0.0
    %310 = vmatpush1.msra.mxu0 0.0
    %311 = vmatprep.subr.mxu0 0.0
    %312 = vmatpush1.msra.mxu0 0.0
    %313 = vmatprep.subr.mxu0 0.0
    %314 = vmatpush1.msra.mxu0 0.0
    %315 = vmatprep.mubr.f32.mxu0 0.0
    %316 = vmatmul.mubr.f32.gmra.mrb[0].mxu0 %v115
    %v317 = vpop.f32.mrb[0].mxu0
    %v318 = vadd.f32 %v109, %v317
    %v319 = vpop.f32.mrb[0].mxu0
    %320 = vmatprep.mubr.f32.mxu0 0.0
    %321 = vmatmul.mubr.f32.gmra.mrb[0].mxu0 %v118
    %v322 = vpop.f32.mrb[0].mxu0
    %v323 = vadd.f32 %v109, %v322
    %v324 = vpop.f32.mrb[0].mxu0
    %325 = vmatprep.mubr.f32.mxu0 0.0
    %326 = vmatmul.mubr.f32.gmra.mrb[0].mxu0 %v121
    %v327 = vpop.f32.mrb[0].mxu0
    %v328 = vadd.f32 %v109, %v327
    %v329 = vpop.f32.mrb[0].mxu0
    %330 = vmatprep.mubr.f32.mxu0 0.0
    %331 = vmatmul.mubr.f32.gmra.mrb[0].mxu0 %v124
    %v332 = vpop.f32.mrb[0].mxu0
    %v333 = vadd.f32 %v109, %v332
    %v334 = vpop.f32.mrb[0].mxu0
    %335 = vmatprep.mubr.f32.mxu0 0.0
    %336 = vmatmul.mubr.f32.gmra.mrb[0].mxu0 %v127
    %v337 = vpop.f32.mrb[0].mxu0
    %v338 = vadd.f32 %v109, %v337
    %v339 = vpop.f32.mrb[0].mxu0
    %340 = vmatprep.mubr.f32.mxu0 0.0
    %341 = vmatmul.mubr.f32.gmra.mrb[0].mxu0 %v130
    %v342 = vpop.f32.mrb[0].mxu0
    %v343 = vadd.f32 %v109, %v342
    %v344 = vpop.f32.mrb[0].mxu0
    %345 = vmatprep.mubr.f32.mxu0 0.0
    %346 = vmatmul.mubr.f32.gmra.mrb[0].mxu0 %v133
    %v347 = vpop.f32.mrb[0].mxu0
    %v348 = vadd.f32 %v109, %v347
    %v349 = vpop.f32.mrb[0].mxu0
    %350 = vmatprep.mubr.f32.mxu0 0.0
    %351 = vmatmul.mubr.f32.gmra.mrb[0].mxu0 %v136
    %v352 = vpop.f32.mrb[0].mxu0
    %v353 = vadd.f32 %v109, %v352
    %v354 = vpop.f32.mrb[0].mxu0
    %355 = vdwg.mxu0
    %356 = vst [vmem:[#allocation3] sm:$0xff] %v205
    %357 = vst [vmem:[#allocation3 + $0x8] sm:$0xff] %v207
    %358 = vst [vmem:[#allocation3 + $0x10] sm:$0xff] %v318
    %359 = vst [vmem:[#allocation3 + $0x18] sm:$0xff] %v211
    %360 = vst [vmem:[#allocation3 + $0x20] sm:$0xff] %v213
    %361 = vst [vmem:[#allocation3 + $0x28] sm:$0xff] %v323
    %362 = vst [vmem:[#allocation3 + $0x30] sm:$0xff] %v217
    %363 = vst [vmem:[#allocation3 + $0x38] sm:$0xff] %v219
    %364 = vst [vmem:[#allocation3 + $0x40] sm:$0xff] %v328
    %365 = vst [vmem:[#allocation3 + $0x48] sm:$0xff] %v223
    %366 = vst [vmem:[#allocation3 + $0x50] sm:$0xff] %v225
    %367 = vst [vmem:[#allocation3 + $0x58] sm:$0xff] %v333
    %368 = vst [vmem:[#allocation3 + $0x60] sm:$0xff] %v229
    %369 = vst [vmem:[#allocation3 + $0x68] sm:$0xff] %v231
    %370 = vst [vmem:[#allocation3 + $0x70] sm:$0xff] %v338
    %371 = vst [vmem:[#allocation3 + $0x78] sm:$0xff] %v235
    %372 = vst [vmem:[#allocation3 + $0x80] sm:$0xff] %v237
    %373 = vst [vmem:[#allocation3 + $0x88] sm:$0xff] %v343
    %374 = vst [vmem:[#allocation3 + $0x90] sm:$0xff] %v241
    %375 = vst [vmem:[#allocation3 + $0x98] sm:$0xff] %v243
    %376 = vst [vmem:[#allocation3 + $0xa0] sm:$0xff] %v348
    %377 = vst [vmem:[#allocation3 + $0xa8] sm:$0xff] %v247
    %378 = vst [vmem:[#allocation3 + $0xb0] sm:$0xff] %v249
    %379 = vst [vmem:[#allocation3 + $0xb8] sm:$0xff] %v353
    %v380 = vld [vmem:[#allocation4] sm:$0xff]
    %v381 = vld [vmem:[#allocation4 + $0x8] sm:$0xff]
    %v382 = vld [vmem:[#allocation4 + $0x10] sm:$0xff]
    %v383 = vld [vmem:[#allocation4 + $0x18] sm:$0xff]
    %v384 = vld [vmem:[#allocation4 + $0x20] sm:$0xff]
    %v385 = vld [vmem:[#allocation4 + $0x28] sm:$0xff]
    %v386 = vld [vmem:[#allocation4 + $0x30] sm:$0xff]
    %v387 = vld [vmem:[#allocation4 + $0x38] sm:$0xff]
    %v388 = vld [vmem:[#allocation4 + $0x40] sm:$0xff]
    %v389 = vld [vmem:[#allocation4 + $0x48] sm:$0xff]
    %v390 = vld [vmem:[#allocation4 + $0x50] sm:$0xff]
    %v391 = vld [vmem:[#allocation4 + $0x58] sm:$0xff]
    %v392 = vld [vmem:[#allocation4 + $0x60] sm:$0xff]
    %v393 = vld [vmem:[#allocation4 + $0x68] sm:$0xff]
    %v394 = vld [vmem:[#allocation4 + $0x70] sm:$0xff]
    %v395 = vld [vmem:[#allocation4 + $0x78] sm:$0xff]
    %v396 = vld [vmem:[#allocation4 + $0x80] sm:$0xff]
    %v397 = vld [vmem:[#allocation4 + $0x88] sm:$0xff]
    %v398 = vld [vmem:[#allocation4 + $0x90] sm:$0xff]
    %v399 = vld [vmem:[#allocation4 + $0x98] sm:$0xff]
    %v400 = vld [vmem:[#allocation4 + $0xa0] sm:$0xff]
    %v401 = vld [vmem:[#allocation4 + $0xa8] sm:$0xff]
    %v402 = vld [vmem:[#allocation4 + $0xb0] sm:$0xff]
    %v403 = vld [vmem:[#allocation4 + $0xb8] sm:$0xff]
    %v404 = vld [vmem:[#allocation4 + $0xc0] sm:$0xff]
    %v405 = vld [vmem:[#allocation4 + $0xc8] sm:$0xff]
    %v406 = vld [vmem:[#allocation4 + $0xd0] sm:$0xff]
    %v407 = vld [vmem:[#allocation4 + $0xd8] sm:$0xff]
    %v408 = vld [vmem:[#allocation4 + $0xe0] sm:$0xff]
    %v409 = vld [vmem:[#allocation4 + $0xe8] sm:$0xff]
    %v410 = vld [vmem:[#allocation4 + $0xf0] sm:$0xff]
    %v411 = vld [vmem:[#allocation4 + $0xf8] sm:$0xff]
    %v412 = vld [vmem:[#allocation4 + $0x100] sm:$0xff]
    %v413 = vld [vmem:[#allocation4 + $0x108] sm:$0xff]
    %v414 = vld [vmem:[#allocation4 + $0x110] sm:$0xff]
    %v415 = vld [vmem:[#allocation4 + $0x118] sm:$0xff]
    %v416 = vld [vmem:[#allocation4 + $0x120] sm:$0xff]
    %v417 = vld [vmem:[#allocation4 + $0x128] sm:$0xff]
    %v418 = vld [vmem:[#allocation4 + $0x130] sm:$0xff]
    %v419 = vld [vmem:[#allocation4 + $0x138] sm:$0xff]
    %v420 = vld [vmem:[#allocation4 + $0x140] sm:$0xff]
    %v421 = vld [vmem:[#allocation4 + $0x148] sm:$0xff]
    %v422 = vld [vmem:[#allocation4 + $0x150] sm:$0xff]
    %v423 = vld [vmem:[#allocation4 + $0x158] sm:$0xff]
    %v424 = vld [vmem:[#allocation4 + $0x160] sm:$0xff]
    %v425 = vld [vmem:[#allocation4 + $0x168] sm:$0xff]
    %v426 = vld [vmem:[#allocation4 + $0x170] sm:$0xff]
    %v427 = vld [vmem:[#allocation4 + $0x178] sm:$0xff]
    %v428 = vld [vmem:[%s4] sm:$0x1]
    %v430 = vlaneseq
    %v431 = vshrl.u32 %v430, 7
    %v432 = vsub.s32 0, %v431
    %v433 = vrot.slane %v428, %v432
    %v435 = vld [vmem:[#allocation2] sm:$0xff]
    %s436 = smul.u32 0, 3
    %s437 = smul.addr %s436, 8
    %s438 = scalar_lea.vmem [#allocation3], %s437
    %v439 = vld [vmem:[%s438] sm:$0xff]
    %v440 = vld [vmem:[%s438 + $0x8] sm:$0xff]
    %v441 = vld [vmem:[%s438 + $0x10] sm:$0xff]
    %442 = vmatprep.subr.mxu0 %v381
    %443 = vmatpush1.msra.mxu0 %v380
    %444 = vmatprep.subr.mxu0 %v384
    %445 = vmatpush1.msra.mxu0 %v383
    %446 = vmatprep.subr.mxu0 %v387
    %447 = vmatpush1.msra.mxu0 %v386
    %448 = vmatprep.subr.mxu0 %v390
    %449 = vmatpush1.msra.mxu0 %v389
    %450 = vmatprep.subr.mxu0 %v393
    %451 = vmatpush1.msra.mxu0 %v392
    %452 = vmatprep.subr.mxu0 %v396
    %453 = vmatpush1.msra.mxu0 %v395
    %454 = vmatprep.subr.mxu0 %v399
    %455 = vmatpush1.msra.mxu0 %v398
    %456 = vmatprep.subr.mxu0 %v402
    %457 = vmatpush1.msra.mxu0 %v401
    %458 = vmatprep.subr.mxu0 %v405
    %459 = vmatpush1.msra.mxu0 %v404
    %460 = vmatprep.subr.mxu0 %v408
    %461 = vmatpush1.msra.mxu0 %v407
    %462 = vmatprep.subr.mxu0 %v411
    %463 = vmatpush1.msra.mxu0 %v410
    %464 = vmatprep.subr.mxu0 %v414
    %465 = vmatpush1.msra.mxu0 %v413
    %466 = vmatprep.subr.mxu0 %v417
    %467 = vmatpush1.msra.mxu0 %v416
    %468 = vmatprep.subr.mxu0 %v420
    %469 = vmatpush1.msra.mxu0 %v419
    %470 = vmatprep.subr.mxu0 %v423
    %471 = vmatpush1.msra.mxu0 %v422
    %472 = vmatprep.subr.mxu0 %v426
    %473 = vmatpush1.msra.mxu0 %v425
    %474 = vmatprep.subr.mxu0 0.0
    %475 = vmatpush1.msra.mxu0 0.0
    %476 = vmatprep.subr.mxu0 0.0
    %477 = vmatpush1.msra.mxu0 0.0
    %478 = vmatprep.subr.mxu0 0.0
    %479 = vmatpush1.msra.mxu0 0.0
    %480 = vmatprep.subr.mxu0 0.0
    %481 = vmatpush1.msra.mxu0 0.0
    %482 = vmatprep.subr.mxu0 0.0
    %483 = vmatpush1.msra.mxu0 0.0
    %484 = vmatprep.subr.mxu0 0.0
    %485 = vmatpush1.msra.mxu0 0.0
    %486 = vmatprep.subr.mxu0 0.0
    %487 = vmatpush1.msra.mxu0 0.0
    %488 = vmatprep.subr.mxu0 0.0
    %489 = vmatpush1.msra.mxu0 0.0
    %490 = vmatprep.subr.mxu0 0.0
    %491 = vmatpush1.msra.mxu0 0.0
    %492 = vmatprep.subr.mxu0 0.0
    %493 = vmatpush1.msra.mxu0 0.0
    %494 = vmatprep.subr.mxu0 0.0
    %495 = vmatpush1.msra.mxu0 0.0
    %496 = vmatprep.subr.mxu0 0.0
    %497 = vmatpush1.msra.mxu0 0.0
    %498 = vmatprep.subr.mxu0 0.0
    %499 = vmatpush1.msra.mxu0 0.0
    %500 = vmatprep.subr.mxu0 0.0
    %501 = vmatpush1.msra.mxu0 0.0
    %502 = vmatprep.subr.mxu0 0.0
    %503 = vmatpush1.msra.mxu0 0.0
    %504 = vmatprep.subr.mxu0 0.0
    %505 = vmatpush1.msra.mxu0 0.0
    %506 = vmatprep.mubr.f32.mxu0 0.0
    %507 = vmatmul.mubr.f32.gmra.mrb[0].mxu0 %v435
    %v508 = vpop.f32.mrb[0].mxu0
    %v509 = vadd.f32 0.0, %v508
    %v510 = vpop.f32.mrb[0].mxu0
    %v511 = vadd.f32 0.0, %v510
    %512 = vdwg.mxu0
    %513 = vmatprep.subr.mxu0 0.0
    %514 = vmatpush1.msra.mxu0 %v382
    %515 = vmatprep.subr.mxu0 0.0
    %516 = vmatpush1.msra.mxu0 %v385
    %517 = vmatprep.subr.mxu0 0.0
    %518 = vmatpush1.msra.mxu0 %v388
    %519 = vmatprep.subr.mxu0 0.0
    %520 = vmatpush1.msra.mxu0 %v391
    %521 = vmatprep.subr.mxu0 0.0
    %522 = vmatpush1.msra.mxu0 %v394
    %523 = vmatprep.subr.mxu0 0.0
    %524 = vmatpush1.msra.mxu0 %v397
    %525 = vmatprep.subr.mxu0 0.0
    %526 = vmatpush1.msra.mxu0 %v400
    %527 = vmatprep.subr.mxu0 0.0
    %528 = vmatpush1.msra.mxu0 %v403
    %529 = vmatprep.subr.mxu0 0.0
    %530 = vmatpush1.msra.mxu0 %v406
    %531 = vmatprep.subr.mxu0 0.0
    %532 = vmatpush1.msra.mxu0 %v409
    %533 = vmatprep.subr.mxu0 0.0
    %534 = vmatpush1.msra.mxu0 %v412
    %535 = vmatprep.subr.mxu0 0.0
    %536 = vmatpush1.msra.mxu0 %v415
    %537 = vmatprep.subr.mxu0 0.0
    %538 = vmatpush1.msra.mxu0 %v418
    %539 = vmatprep.subr.mxu0 0.0
    %540 = vmatpush1.msra.mxu0 %v421
    %541 = vmatprep.subr.mxu0 0.0
    %542 = vmatpush1.msra.mxu0 %v424
    %543 = vmatprep.subr.mxu0 0.0
    %544 = vmatpush1.msra.mxu0 %v427
    %545 = vmatprep.subr.mxu0 0.0
    %546 = vmatpush1.msra.mxu0 0.0
    %547 = vmatprep.subr.mxu0 0.0
    %548 = vmatpush1.msra.mxu0 0.0
    %549 = vmatprep.subr.mxu0 0.0
    %550 = vmatpush1.msra.mxu0 0.0
    %551 = vmatprep.subr.mxu0 0.0
    %552 = vmatpush1.msra.mxu0 0.0
    %553 = vmatprep.subr.mxu0 0.0
    %554 = vmatpush1.msra.mxu0 0.0
    %555 = vmatprep.subr.mxu0 0.0
    %556 = vmatpush1.msra.mxu0 0.0
    %557 = vmatprep.subr.mxu0 0.0
    %558 = vmatpush1.msra.mxu0 0.0
    %559 = vmatprep.subr.mxu0 0.0
    %560 = vmatpush1.msra.mxu0 0.0
    %561 = vmatprep.subr.mxu0 0.0
    %562 = vmatpush1.msra.mxu0 0.0
    %563 = vmatprep.subr.mxu0 0.0
    %564 = vmatpush1.msra.mxu0 0.0
    %565 = vmatprep.subr.mxu0 0.0
    %566 = vmatpush1.msra.mxu0 0.0
    %567 = vmatprep.subr.mxu0 0.0
    %568 = vmatpush1.msra.mxu0 0.0
    %569 = vmatprep.subr.mxu0 0.0
    %570 = vmatpush1.msra.mxu0 0.0
    %571 = vmatprep.subr.mxu0 0.0
    %572 = vmatpush1.msra.mxu0 0.0
    %573 = vmatprep.subr.mxu0 0.0
    %574 = vmatpush1.msra.mxu0 0.0
    %575 = vmatprep.subr.mxu0 0.0
    %576 = vmatpush1.msra.mxu0 0.0
    %577 = vmatprep.mubr.f32.mxu0 0.0
    %578 = vmatmul.mubr.f32.gmra.mrb[0].mxu0 %v435
    %v579 = vpop.f32.mrb[0].mxu0
    %v580 = vadd.f32 0.0, %v579
    %v581 = vpop.f32.mrb[0].mxu0
    %582 = vdwg.mxu0
    %v583 = vadd.f32 %v439, %v509
    %v584 = vxor.u32 %v583, 2147483648
    %v585 = vmul.f32 %v584, 1.442695
    %v586 = vpow.pop %v585
    %v587 = vadd.f32 %v586, 1.0
    %v588 = vrcp.pop %v587
    %v589 = vmul.f32 1.0, %v588
    %v590 = vadd.f32 %v440, %v511
    %v591 = vxor.u32 %v590, 2147483648
    %v592 = vmul.f32 %v591, 1.442695
    %v593 = vpow.pop %v592
    %v594 = vadd.f32 %v593, 1.0
    %v595 = vrcp.pop %v594
    %v596 = vmul.f32 1.0, %v595
    %v597 = vadd.f32 %v580, %v433
    %v598 = vmul.f32 %v589, %v597
    %v599 = vadd.f32 %v441, %v598
    %v600 = vtanh.pop %v599
    %v601 = vsub.f32 1.0, %v596
    %v602 = vmul.f32 %v601, %v600
    %v603 = vmul.f32 %v596, %v435
    %v604 = vadd.f32 %v602, %v603
    %s605 = smul.u32 1, 3
    %s606 = smul.addr %s605, 8
    %s607 = scalar_lea.vmem [#allocation3], %s606
    %v608 = vld [vmem:[%s607] sm:$0xff]
    %v609 = vld [vmem:[%s607 + $0x8] sm:$0xff]
    %v610 = vld [vmem:[%s607 + $0x10] sm:$0xff]
    %611 = vmatprep.subr.mxu0 %v381
    %612 = vmatpush1.msra.mxu0 %v380
    %613 = vmatprep.subr.mxu0 %v384
    %614 = vmatpush1.msra.mxu0 %v383
    %615 = vmatprep.subr.mxu0 %v387
    %616 = vmatpush1.msra.mxu0 %v386
    %617 = vmatprep.subr.mxu0 %v390
    %618 = vmatpush1.msra.mxu0 %v389
    %619 = vmatprep.subr.mxu0 %v393
    %620 = vmatpush1.msra.mxu0 %v392
    %621 = vmatprep.subr.mxu0 %v396
    %622 = vmatpush1.msra.mxu0 %v395
    %623 = vmatprep.subr.mxu0 %v399
    %624 = vmatpush1.msra.mxu0 %v398
    %625 = vmatprep.subr.mxu0 %v402
    %626 = vmatpush1.msra.mxu0 %v401
    %627 = vmatprep.subr.mxu0 %v405
    %628 = vmatpush1.msra.mxu0 %v404
    %629 = vmatprep.subr.mxu0 %v408
    %630 = vmatpush1.msra.mxu0 %v407
    %631 = vmatprep.subr.mxu0 %v411
    %632 = vmatpush1.msra.mxu0 %v410
    %633 = vmatprep.subr.mxu0 %v414
    %634 = vmatpush1.msra.mxu0 %v413
    %635 = vmatprep.subr.mxu0 %v417
    %636 = vmatpush1.msra.mxu0 %v416
    %637 = vmatprep.subr.mxu0 %v420
    %638 = vmatpush1.msra.mxu0 %v419
    %639 = vmatprep.subr.mxu0 %v423
    %640 = vmatpush1.msra.mxu0 %v422
    %641 = vmatprep.subr.mxu0 %v426
    %642 = vmatpush1.msra.mxu0 %v425
    %643 = vmatprep.subr.mxu0 0.0
    %644 = vmatpush1.msra.mxu0 0.0
    %645 = vmatprep.subr.mxu0 0.0
    %646 = vmatpush1.msra.mxu0 0.0
    %647 = vmatprep.subr.mxu0 0.0
    %648 = vmatpush1.msra.mxu0 0.0
    %649 = vmatprep.subr.mxu0 0.0
    %650 = vmatpush1.msra.mxu0 0.0
    %651 = vmatprep.subr.mxu0 0.0
    %652 = vmatpush1.msra.mxu0 0.0
    %653 = vmatprep.subr.mxu0 0.0
    %654 = vmatpush1.msra.mxu0 0.0
    %655 = vmatprep.subr.mxu0 0.0
    %656 = vmatpush1.msra.mxu0 0.0
    %657 = vmatprep.subr.mxu0 0.0
    %658 = vmatpush1.msra.mxu0 0.0
    %659 = vmatprep.subr.mxu0 0.0
    %660 = vmatpush1.msra.mxu0 0.0
    %661 = vmatprep.subr.mxu0 0.0
    %662 = vmatpush1.msra.mxu0 0.0
    %663 = vmatprep.subr.mxu0 0.0
    %664 = vmatpush1.msra.mxu0 0.0
    %665 = vmatprep.subr.mxu0 0.0
    %666 = vmatpush1.msra.mxu0 0.0
    %667 = vmatprep.subr.mxu0 0.0
    %668 = vmatpush1.msra.mxu0 0.0
    %669 = vmatprep.subr.mxu0 0.0
    %670 = vmatpush1.msra.mxu0 0.0
    %671 = vmatprep.subr.mxu0 0.0
    %672 = vmatpush1.msra.mxu0 0.0
    %673 = vmatprep.subr.mxu0 0.0
    %674 = vmatpush1.msra.mxu0 0.0
    %675 = vmatprep.mubr.f32.mxu0 0.0
    %676 = vmatmul.mubr.f32.gmra.mrb[0].mxu0 %v604
    %v677 = vpop.f32.mrb[0].mxu0
    %v678 = vadd.f32 0.0, %v677
    %v679 = vpop.f32.mrb[0].mxu0
    %v680 = vadd.f32 0.0, %v679
    %681 = vdwg.mxu0
    %682 = vmatprep.subr.mxu0 0.0
    %683 = vmatpush1.msra.mxu0 %v382
    %684 = vmatprep.subr.mxu0 0.0
    %685 = vmatpush1.msra.mxu0 %v385
    %686 = vmatprep.subr.mxu0 0.0
    %687 = vmatpush1.msra.mxu0 %v388
    %688 = vmatprep.subr.mxu0 0.0
    %689 = vmatpush1.msra.mxu0 %v391
    %690 = vmatprep.subr.mxu0 0.0
    %691 = vmatpush1.msra.mxu0 %v394
    %692 = vmatprep.subr.mxu0 0.0
    %693 = vmatpush1.msra.mxu0 %v397
    %694 = vmatprep.subr.mxu0 0.0
    %695 = vmatpush1.msra.mxu0 %v400
    %696 = vmatprep.subr.mxu0 0.0
    %697 = vmatpush1.msra.mxu0 %v403
    %698 = vmatprep.subr.mxu0 0.0
    %699 = vmatpush1.msra.mxu0 %v406
    %700 = vmatprep.subr.mxu0 0.0
    %701 = vmatpush1.msra.mxu0 %v409
    %702 = vmatprep.subr.mxu0 0.0
    %703 = vmatpush1.msra.mxu0 %v412
    %704 = vmatprep.subr.mxu0 0.0
    %705 = vmatpush1.msra.mxu0 %v415
    %706 = vmatprep.subr.mxu0 0.0
    %707 = vmatpush1.msra.mxu0 %v418
    %708 = vmatprep.subr.mxu0 0.0
    %709 = vmatpush1.msra.mxu0 %v421
    %710 = vmatprep.subr.mxu0 0.0
    %711 = vmatpush1.msra.mxu0 %v424
    %712 = vmatprep.subr.mxu0 0.0
    %713 = vmatpush1.msra.mxu0 %v427
    %714 = vmatprep.subr.mxu0 0.0
    %715 = vmatpush1.msra.mxu0 0.0
    %716 = vmatprep.subr.mxu0 0.0
    %717 = vmatpush1.msra.mxu0 0.0
    %718 = vmatprep.subr.mxu0 0.0
    %719 = vmatpush1.msra.mxu0 0.0
    %720 = vmatprep.subr.mxu0 0.0
    %721 = vmatpush1.msra.mxu0 0.0
    %722 = vmatprep.subr.mxu0 0.0
    %723 = vmatpush1.msra.mxu0 0.0
    %724 = vmatprep.subr.mxu0 0.0
    %725 = vmatpush1.msra.mxu0 0.0
    %726 = vmatprep.subr.mxu0 0.0
    %727 = vmatpush1.msra.mxu0 0.0
    %728 = vmatprep.subr.mxu0 0.0
    %729 = vmatpush1.msra.mxu0 0.0
    %730 = vmatprep.subr.mxu0 0.0
    %731 = vmatpush1.msra.mxu0 0.0
    %732 = vmatprep.subr.mxu0 0.0
    %733 = vmatpush1.msra.mxu0 0.0
    %734 = vmatprep.subr.mxu0 0.0
    %735 = vmatpush1.msra.mxu0 0.0
    %736 = vmatprep.subr.mxu0 0.0
    %737 = vmatpush1.msra.mxu0 0.0
    %738 = vmatprep.subr.mxu0 0.0
    %739 = vmatpush1.msra.mxu0 0.0
    %740 = vmatprep.subr.mxu0 0.0
    %741 = vmatpush1.msra.mxu0 0.0
    %742 = vmatprep.subr.mxu0 0.0
    %743 = vmatpush1.msra.mxu0 0.0
    %744 = vmatprep.subr.mxu0 0.0
    %745 = vmatpush1.msra.mxu0 0.0
    %746 = vmatprep.mubr.f32.mxu0 0.0
    %747 = vmatmul.mubr.f32.gmra.mrb[0].mxu0 %v604
    %v748 = vpop.f32.mrb[0].mxu0
    %v749 = vadd.f32 0.0, %v748
    %v750 = vpop.f32.mrb[0].mxu0
    %751 = vdwg.mxu0
    %v752 = vadd.f32 %v608, %v678
    %v753 = vxor.u32 %v752, 2147483648
    %v754 = vmul.f32 %v753, 1.442695
    %v755 = vpow.pop %v754
    %v756 = vadd.f32 %v755, 1.0
    %v757 = vrcp.pop %v756
    %v758 = vmul.f32 1.0, %v757
    %v759 = vadd.f32 %v609, %v680
    %v760 = vxor.u32 %v759, 2147483648
    %v761 = vmul.f32 %v760, 1.442695
    %v762 = vpow.pop %v761
    %v763 = vadd.f32 %v762, 1.0
    %v764 = vrcp.pop %v763
    %v765 = vmul.f32 1.0, %v764
    %v766 = vadd.f32 %v749, %v433
    %v767 = vmul.f32 %v758, %v766
    %v768 = vadd.f32 %v610, %v767
    %v769 = vtanh.pop %v768
    %v770 = vsub.f32 1.0, %v765
    %v771 = vmul.f32 %v770, %v769
    %v772 = vmul.f32 %v765, %v604
    %v773 = vadd.f32 %v771, %v772
    %s774 = smul.u32 2, 3
    %s775 = smul.addr %s774, 8
    %s776 = scalar_lea.vmem [#allocation3], %s775
    %v777 = vld [vmem:[%s776] sm:$0xff]
    %v778 = vld [vmem:[%s776 + $0x8] sm:$0xff]
    %v779 = vld [vmem:[%s776 + $0x10] sm:$0xff]
    %780 = vmatprep.subr.mxu0 %v381
    %781 = vmatpush1.msra.mxu0 %v380
    %782 = vmatprep.subr.mxu0 %v384
    %783 = vmatpush1.msra.mxu0 %v383
    %784 = vmatprep.subr.mxu0 %v387
    %785 = vmatpush1.msra.mxu0 %v386
    %786 = vmatprep.subr.mxu0 %v390
    %787 = vmatpush1.msra.mxu0 %v389
    %788 = vmatprep.subr.mxu0 %v393
    %789 = vmatpush1.msra.mxu0 %v392
    %790 = vmatprep.subr.mxu0 %v396
    %791 = vmatpush1.msra.mxu0 %v395
    %792 = vmatprep.subr.mxu0 %v399
    %793 = vmatpush1.msra.mxu0 %v398
    %794 = vmatprep.subr.mxu0 %v402
    %795 = vmatpush1.msra.mxu0 %v401
    %796 = vmatprep.subr.mxu0 %v405
    %797 = vmatpush1.msra.mxu0 %v404
    %798 = vmatprep.subr.mxu0 %v408
    %799 = vmatpush1.msra.mxu0 %v407
    %800 = vmatprep.subr.mxu0 %v411
    %801 = vmatpush1.msra.mxu0 %v410
    %802 = vmatprep.subr.mxu0 %v414
    %803 = vmatpush1.msra.mxu0 %v413
    %804 = vmatprep.subr.mxu0 %v417
    %805 = vmatpush1.msra.mxu0 %v416
    %806 = vmatprep.subr.mxu0 %v420
    %807 = vmatpush1.msra.mxu0 %v419
    %808 = vmatprep.subr.mxu0 %v423
    %809 = vmatpush1.msra.mxu0 %v422
    %810 = vmatprep.subr.mxu0 %v426
    %811 = vmatpush1.msra.mxu0 %v425
    %812 = vmatprep.subr.mxu0 0.0
    %813 = vmatpush1.msra.mxu0 0.0
    %814 = vmatprep.subr.mxu0 0.0
    %815 = vmatpush1.msra.mxu0 0.0
    %816 = vmatprep.subr.mxu0 0.0
    %817 = vmatpush1.msra.mxu0 0.0
    %818 = vmatprep.subr.mxu0 0.0
    %819 = vmatpush1.msra.mxu0 0.0
    %820 = vmatprep.subr.mxu0 0.0
    %821 = vmatpush1.msra.mxu0 0.0
    %822 = vmatprep.subr.mxu0 0.0
    %823 = vmatpush1.msra.mxu0 0.0
    %824 = vmatprep.subr.mxu0 0.0
    %825 = vmatpush1.msra.mxu0 0.0
    %826 = vmatprep.subr.mxu0 0.0
    %827 = vmatpush1.msra.mxu0 0.0
    %828 = vmatprep.subr.mxu0 0.0
    %829 = vmatpush1.msra.mxu0 0.0
    %830 = vmatprep.subr.mxu0 0.0
    %831 = vmatpush1.msra.mxu0 0.0
    %832 = vmatprep.subr.mxu0 0.0
    %833 = vmatpush1.msra.mxu0 0.0
    %834 = vmatprep.subr.mxu0 0.0
    %835 = vmatpush1.msra.mxu0 0.0
    %836 = vmatprep.subr.mxu0 0.0
    %837 = vmatpush1.msra.mxu0 0.0
    %838 = vmatprep.subr.mxu0 0.0
    %839 = vmatpush1.msra.mxu0 0.0
    %840 = vmatprep.subr.mxu0 0.0
    %841 = vmatpush1.msra.mxu0 0.0
    %842 = vmatprep.subr.mxu0 0.0
    %843 = vmatpush1.msra.mxu0 0.0
    %844 = vmatprep.mubr.f32.mxu0 0.0
    %845 = vmatmul.mubr.f32.gmra.mrb[0].mxu0 %v773
    %v846 = vpop.f32.mrb[0].mxu0
    %v847 = vadd.f32 0.0, %v846
    %v848 = vpop.f32.mrb[0].mxu0
    %v849 = vadd.f32 0.0, %v848
    %850 = vdwg.mxu0
    %851 = vmatprep.subr.mxu0 0.0
    %852 = vmatpush1.msra.mxu0 %v382
    %853 = vmatprep.subr.mxu0 0.0
    %854 = vmatpush1.msra.mxu0 %v385
    %855 = vmatprep.subr.mxu0 0.0
    %856 = vmatpush1.msra.mxu0 %v388
    %857 = vmatprep.subr.mxu0 0.0
    %858 = vmatpush1.msra.mxu0 %v391
    %859 = vmatprep.subr.mxu0 0.0
    %860 = vmatpush1.msra.mxu0 %v394
    %861 = vmatprep.subr.mxu0 0.0
    %862 = vmatpush1.msra.mxu0 %v397
    %863 = vmatprep.subr.mxu0 0.0
    %864 = vmatpush1.msra.mxu0 %v400
    %865 = vmatprep.subr.mxu0 0.0
    %866 = vmatpush1.msra.mxu0 %v403
    %867 = vmatprep.subr.mxu0 0.0
    %868 = vmatpush1.msra.mxu0 %v406
    %869 = vmatprep.subr.mxu0 0.0
    %870 = vmatpush1.msra.mxu0 %v409
    %871 = vmatprep.subr.mxu0 0.0
    %872 = vmatpush1.msra.mxu0 %v412
    %873 = vmatprep.subr.mxu0 0.0
    %874 = vmatpush1.msra.mxu0 %v415
    %875 = vmatprep.subr.mxu0 0.0
    %876 = vmatpush1.msra.mxu0 %v418
    %877 = vmatprep.subr.mxu0 0.0
    %878 = vmatpush1.msra.mxu0 %v421
    %879 = vmatprep.subr.mxu0 0.0
    %880 = vmatpush1.msra.mxu0 %v424
    %881 = vmatprep.subr.mxu0 0.0
    %882 = vmatpush1.msra.mxu0 %v427
    %883 = vmatprep.subr.mxu0 0.0
    %884 = vmatpush1.msra.mxu0 0.0
    %885 = vmatprep.subr.mxu0 0.0
    %886 = vmatpush1.msra.mxu0 0.0
    %887 = vmatprep.subr.mxu0 0.0
    %888 = vmatpush1.msra.mxu0 0.0
    %889 = vmatprep.subr.mxu0 0.0
    %890 = vmatpush1.msra.mxu0 0.0
    %891 = vmatprep.subr.mxu0 0.0
    %892 = vmatpush1.msra.mxu0 0.0
    %893 = vmatprep.subr.mxu0 0.0
    %894 = vmatpush1.msra.mxu0 0.0
    %895 = vmatprep.subr.mxu0 0.0
    %896 = vmatpush1.msra.mxu0 0.0
    %897 = vmatprep.subr.mxu0 0.0
    %898 = vmatpush1.msra.mxu0 0.0
    %899 = vmatprep.subr.mxu0 0.0
    %900 = vmatpush1.msra.mxu0 0.0
    %901 = vmatprep.subr.mxu0 0.0
    %902 = vmatpush1.msra.mxu0 0.0
    %903 = vmatprep.subr.mxu0 0.0
    %904 = vmatpush1.msra.mxu0 0.0
    %905 = vmatprep.subr.mxu0 0.0
    %906 = vmatpush1.msra.mxu0 0.0
    %907 = vmatprep.subr.mxu0 0.0
    %908 = vmatpush1.msra.mxu0 0.0
    %909 = vmatprep.subr.mxu0 0.0
    %910 = vmatpush1.msra.mxu0 0.0
    %911 = vmatprep.subr.mxu0 0.0
    %912 = vmatpush1.msra.mxu0 0.0
    %913 = vmatprep.subr.mxu0 0.0
    %914 = vmatpush1.msra.mxu0 0.0
    %915 = vmatprep.mubr.f32.mxu0 0.0
    %916 = vmatmul.mubr.f32.gmra.mrb[0].mxu0 %v773
    %v917 = vpop.f32.mrb[0].mxu0
    %v918 = vadd.f32 0.0, %v917
    %v919 = vpop.f32.mrb[0].mxu0
    %920 = vdwg.mxu0
    %v921 = vadd.f32 %v777, %v847
    %v922 = vxor.u32 %v921, 2147483648
    %v923 = vmul.f32 %v922, 1.442695
    %v924 = vpow.pop %v923
    %v925 = vadd.f32 %v924, 1.0
    %v926 = vrcp.pop %v925
    %v927 = vmul.f32 1.0, %v926
    %v928 = vadd.f32 %v778, %v849
    %v929 = vxor.u32 %v928, 2147483648
    %v930 = vmul.f32 %v929, 1.442695
    %v931 = vpow.pop %v930
    %v932 = vadd.f32 %v931, 1.0
    %v933 = vrcp.pop %v932
    %v934 = vmul.f32 1.0, %v933
    %v935 = vadd.f32 %v918, %v433
    %v936 = vmul.f32 %v927, %v935
    %v937 = vadd.f32 %v779, %v936
    %v938 = vtanh.pop %v937
    %v939 = vsub.f32 1.0, %v934
    %v940 = vmul.f32 %v939, %v938
    %v941 = vmul.f32 %v934, %v773
    %v942 = vadd.f32 %v940, %v941
    %s943 = smul.u32 3, 3
    %s944 = smul.addr %s943, 8
    %s945 = scalar_lea.vmem [#allocation3], %s944
    %v946 = vld [vmem:[%s945] sm:$0xff]
    %v947 = vld [vmem:[%s945 + $0x8] sm:$0xff]
    %v948 = vld [vmem:[%s945 + $0x10] sm:$0xff]
    %949 = vmatprep.subr.mxu0 %v381
    %950 = vmatpush1.msra.mxu0 %v380
    %951 = vmatprep.subr.mxu0 %v384
    %952 = vmatpush1.msra.mxu0 %v383
    %953 = vmatprep.subr.mxu0 %v387
    %954 = vmatpush1.msra.mxu0 %v386
    %955 = vmatprep.subr.mxu0 %v390
    %956 = vmatpush1.msra.mxu0 %v389
    %957 = vmatprep.subr.mxu0 %v393
    %958 = vmatpush1.msra.mxu0 %v392
    %959 = vmatprep.subr.mxu0 %v396
    %960 = vmatpush1.msra.mxu0 %v395
    %961 = vmatprep.subr.mxu0 %v399
    %962 = vmatpush1.msra.mxu0 %v398
    %963 = vmatprep.subr.mxu0 %v402
    %964 = vmatpush1.msra.mxu0 %v401
    %965 = vmatprep.subr.mxu0 %v405
    %966 = vmatpush1.msra.mxu0 %v404
    %967 = vmatprep.subr.mxu0 %v408
    %968 = vmatpush1.msra.mxu0 %v407
    %969 = vmatprep.subr.mxu0 %v411
    %970 = vmatpush1.msra.mxu0 %v410
    %971 = vmatprep.subr.mxu0 %v414
    %972 = vmatpush1.msra.mxu0 %v413
    %973 = vmatprep.subr.mxu0 %v417
    %974 = vmatpush1.msra.mxu0 %v416
    %975 = vmatprep.subr.mxu0 %v420
    %976 = vmatpush1.msra.mxu0 %v419
    %977 = vmatprep.subr.mxu0 %v423
    %978 = vmatpush1.msra.mxu0 %v422
    %979 = vmatprep.subr.mxu0 %v426
    %980 = vmatpush1.msra.mxu0 %v425
    %981 = vmatprep.subr.mxu0 0.0
    %982 = vmatpush1.msra.mxu0 0.0
    %983 = vmatprep.subr.mxu0 0.0
    %984 = vmatpush1.msra.mxu0 0.0
    %985 = vmatprep.subr.mxu0 0.0
    %986 = vmatpush1.msra.mxu0 0.0
    %987 = vmatprep.subr.mxu0 0.0
    %988 = vmatpush1.msra.mxu0 0.0
    %989 = vmatprep.subr.mxu0 0.0
    %990 = vmatpush1.msra.mxu0 0.0
    %991 = vmatprep.subr.mxu0 0.0
    %992 = vmatpush1.msra.mxu0 0.0
    %993 = vmatprep.subr.mxu0 0.0
    %994 = vmatpush1.msra.mxu0 0.0
    %995 = vmatprep.subr.mxu0 0.0
    %996 = vmatpush1.msra.mxu0 0.0
    %997 = vmatprep.subr.mxu0 0.0
    %998 = vmatpush1.msra.mxu0 0.0
    %999 = vmatprep.subr.mxu0 0.0
    %1000 = vmatpush1.msra.mxu0 0.0
    %1001 = vmatprep.subr.mxu0 0.0
    %1002 = vmatpush1.msra.mxu0 0.0
    %1003 = vmatprep.subr.mxu0 0.0
    %1004 = vmatpush1.msra.mxu0 0.0
    %1005 = vmatprep.subr.mxu0 0.0
    %1006 = vmatpush1.msra.mxu0 0.0
    %1007 = vmatprep.subr.mxu0 0.0
    %1008 = vmatpush1.msra.mxu0 0.0
    %1009 = vmatprep.subr.mxu0 0.0
    %1010 = vmatpush1.msra.mxu0 0.0
    %1011 = vmatprep.subr.mxu0 0.0
    %1012 = vmatpush1.msra.mxu0 0.0
    %1013 = vmatprep.mubr.f32.mxu0 0.0
    %1014 = vmatmul.mubr.f32.gmra.mrb[0].mxu0 %v942
    %v1015 = vpop.f32.mrb[0].mxu0
    %v1016 = vadd.f32 0.0, %v1015
    %v1017 = vpop.f32.mrb[0].mxu0
    %v1018 = vadd.f32 0.0, %v1017
    %1019 = vdwg.mxu0
    %1020 = vmatprep.subr.mxu0 0.0
    %1021 = vmatpush1.msra.mxu0 %v382
    %1022 = vmatprep.subr.mxu0 0.0
    %1023 = vmatpush1.msra.mxu0 %v385
    %1024 = vmatprep.subr.mxu0 0.0
    %1025 = vmatpush1.msra.mxu0 %v388
    %1026 = vmatprep.subr.mxu0 0.0
    %1027 = vmatpush1.msra.mxu0 %v391
    %1028 = vmatprep.subr.mxu0 0.0
    %1029 = vmatpush1.msra.mxu0 %v394
    %1030 = vmatprep.subr.mxu0 0.0
    %1031 = vmatpush1.msra.mxu0 %v397
    %1032 = vmatprep.subr.mxu0 0.0
    %1033 = vmatpush1.msra.mxu0 %v400
    %1034 = vmatprep.subr.mxu0 0.0
    %1035 = vmatpush1.msra.mxu0 %v403
    %1036 = vmatprep.subr.mxu0 0.0
    %1037 = vmatpush1.msra.mxu0 %v406
    %1038 = vmatprep.subr.mxu0 0.0
    %1039 = vmatpush1.msra.mxu0 %v409
    %1040 = vmatprep.subr.mxu0 0.0
    %1041 = vmatpush1.msra.mxu0 %v412
    %1042 = vmatprep.subr.mxu0 0.0
    %1043 = vmatpush1.msra.mxu0 %v415
    %1044 = vmatprep.subr.mxu0 0.0
    %1045 = vmatpush1.msra.mxu0 %v418
    %1046 = vmatprep.subr.mxu0 0.0
    %1047 = vmatpush1.msra.mxu0 %v421
    %1048 = vmatprep.subr.mxu0 0.0
    %1049 = vmatpush1.msra.mxu0 %v424
    %1050 = vmatprep.subr.mxu0 0.0
    %1051 = vmatpush1.msra.mxu0 %v427
    %1052 = vmatprep.subr.mxu0 0.0
    %1053 = vmatpush1.msra.mxu0 0.0
    %1054 = vmatprep.subr.mxu0 0.0
    %1055 = vmatpush1.msra.mxu0 0.0
    %1056 = vmatprep.subr.mxu0 0.0
    %1057 = vmatpush1.msra.mxu0 0.0
    %1058 = vmatprep.subr.mxu0 0.0
    %1059 = vmatpush1.msra.mxu0 0.0
    %1060 = vmatprep.subr.mxu0 0.0
    %1061 = vmatpush1.msra.mxu0 0.0
    %1062 = vmatprep.subr.mxu0 0.0
    %1063 = vmatpush1.msra.mxu0 0.0
    %1064 = vmatprep.subr.mxu0 0.0
    %1065 = vmatpush1.msra.mxu0 0.0
    %1066 = vmatprep.subr.mxu0 0.0
    %1067 = vmatpush1.msra.mxu0 0.0
    %1068 = vmatprep.subr.mxu0 0.0
    %1069 = vmatpush1.msra.mxu0 0.0
    %1070 = vmatprep.subr.mxu0 0.0
    %1071 = vmatpush1.msra.mxu0 0.0
    %1072 = vmatprep.subr.mxu0 0.0
    %1073 = vmatpush1.msra.mxu0 0.0
    %1074 = vmatprep.subr.mxu0 0.0
    %1075 = vmatpush1.msra.mxu0 0.0
    %1076 = vmatprep.subr.mxu0 0.0
    %1077 = vmatpush1.msra.mxu0 0.0
    %1078 = vmatprep.subr.mxu0 0.0
    %1079 = vmatpush1.msra.mxu0 0.0
    %1080 = vmatprep.subr.mxu0 0.0
    %1081 = vmatpush1.msra.mxu0 0.0
    %1082 = vmatprep.subr.mxu0 0.0
    %1083 = vmatpush1.msra.mxu0 0.0
    %1084 = vmatprep.mubr.f32.mxu0 0.0
    %1085 = vmatmul.mubr.f32.gmra.mrb[0].mxu0 %v942
    %v1086 = vpop.f32.mrb[0].mxu0
    %v1087 = vadd.f32 0.0, %v1086
    %v1088 = vpop.f32.mrb[0].mxu0
    %1089 = vdwg.mxu0
    %v1090 = vadd.f32 %v946, %v1016
    %v1091 = vxor.u32 %v1090, 2147483648
    %v1092 = vmul.f32 %v1091, 1.442695
    %v1093 = vpow.pop %v1092
    %v1094 = vadd.f32 %v1093, 1.0
    %v1095 = vrcp.pop %v1094
    %v1096 = vmul.f32 1.0, %v1095
    %v1097 = vadd.f32 %v947, %v1018
    %v1098 = vxor.u32 %v1097, 2147483648
    %v1099 = vmul.f32 %v1098, 1.442695
    %v1100 = vpow.pop %v1099
    %v1101 = vadd.f32 %v1100, 1.0
    %v1102 = vrcp.pop %v1101
    %v1103 = vmul.f32 1.0, %v1102
    %v1104 = vadd.f32 %v1087, %v433
    %v1105 = vmul.f32 %v1096, %v1104
    %v1106 = vadd.f32 %v948, %v1105
    %v1107 = vtanh.pop %v1106
    %v1108 = vsub.f32 1.0, %v1103
    %v1109 = vmul.f32 %v1108, %v1107
    %v1110 = vmul.f32 %v1103, %v942
    %v1111 = vadd.f32 %v1109, %v1110
    %s1112 = smul.u32 4, 3
    %s1113 = smul.addr %s1112, 8
    %s1114 = scalar_lea.vmem [#allocation3], %s1113
    %v1115 = vld [vmem:[%s1114] sm:$0xff]
    %v1116 = vld [vmem:[%s1114 + $0x8] sm:$0xff]
    %v1117 = vld [vmem:[%s1114 + $0x10] sm:$0xff]
    %1118 = vmatprep.subr.mxu0 %v381
    %1119 = vmatpush1.msra.mxu0 %v380
    %1120 = vmatprep.subr.mxu0 %v384
    %1121 = vmatpush1.msra.mxu0 %v383
    %1122 = vmatprep.subr.mxu0 %v387
    %1123 = vmatpush1.msra.mxu0 %v386
    %1124 = vmatprep.subr.mxu0 %v390
    %1125 = vmatpush1.msra.mxu0 %v389
    %1126 = vmatprep.subr.mxu0 %v393
    %1127 = vmatpush1.msra.mxu0 %v392
    %1128 = vmatprep.subr.mxu0 %v396
    %1129 = vmatpush1.msra.mxu0 %v395
    %1130 = vmatprep.subr.mxu0 %v399
    %1131 = vmatpush1.msra.mxu0 %v398
    %1132 = vmatprep.subr.mxu0 %v402
    %1133 = vmatpush1.msra.mxu0 %v401
    %1134 = vmatprep.subr.mxu0 %v405
    %1135 = vmatpush1.msra.mxu0 %v404
    %1136 = vmatprep.subr.mxu0 %v408
    %1137 = vmatpush1.msra.mxu0 %v407
    %1138 = vmatprep.subr.mxu0 %v411
    %1139 = vmatpush1.msra.mxu0 %v410
    %1140 = vmatprep.subr.mxu0 %v414
    %1141 = vmatpush1.msra.mxu0 %v413
    %1142 = vmatprep.subr.mxu0 %v417
    %1143 = vmatpush1.msra.mxu0 %v416
    %1144 = vmatprep.subr.mxu0 %v420
    %1145 = vmatpush1.msra.mxu0 %v419
    %1146 = vmatprep.subr.mxu0 %v423
    %1147 = vmatpush1.msra.mxu0 %v422
    %1148 = vmatprep.subr.mxu0 %v426
    %1149 = vmatpush1.msra.mxu0 %v425
    %1150 = vmatprep.subr.mxu0 0.0
    %1151 = vmatpush1.msra.mxu0 0.0
    %1152 = vmatprep.subr.mxu0 0.0
    %1153 = vmatpush1.msra.mxu0 0.0
    %1154 = vmatprep.subr.mxu0 0.0
    %1155 = vmatpush1.msra.mxu0 0.0
    %1156 = vmatprep.subr.mxu0 0.0
    %1157 = vmatpush1.msra.mxu0 0.0
    %1158 = vmatprep.subr.mxu0 0.0
    %1159 = vmatpush1.msra.mxu0 0.0
    %1160 = vmatprep.subr.mxu0 0.0
    %1161 = vmatpush1.msra.mxu0 0.0
    %1162 = vmatprep.subr.mxu0 0.0
    %1163 = vmatpush1.msra.mxu0 0.0
    %1164 = vmatprep.subr.mxu0 0.0
    %1165 = vmatpush1.msra.mxu0 0.0
    %1166 = vmatprep.subr.mxu0 0.0
    %1167 = vmatpush1.msra.mxu0 0.0
    %1168 = vmatprep.subr.mxu0 0.0
    %1169 = vmatpush1.msra.mxu0 0.0
    %1170 = vmatprep.subr.mxu0 0.0
    %1171 = vmatpush1.msra.mxu0 0.0
    %1172 = vmatprep.subr.mxu0 0.0
    %1173 = vmatpush1.msra.mxu0 0.0
    %1174 = vmatprep.subr.mxu0 0.0
    %1175 = vmatpush1.msra.mxu0 0.0
    %1176 = vmatprep.subr.mxu0 0.0
    %1177 = vmatpush1.msra.mxu0 0.0
    %1178 = vmatprep.subr.mxu0 0.0
    %1179 = vmatpush1.msra.mxu0 0.0
    %1180 = vmatprep.subr.mxu0 0.0
    %1181 = vmatpush1.msra.mxu0 0.0
    %1182 = vmatprep.mubr.f32.mxu0 0.0
    %1183 = vmatmul.mubr.f32.gmra.mrb[0].mxu0 %v1111
    %v1184 = vpop.f32.mrb[0].mxu0
    %v1185 = vadd.f32 0.0, %v1184
    %v1186 = vpop.f32.mrb[0].mxu0
    %v1187 = vadd.f32 0.0, %v1186
    %1188 = vdwg.mxu0
    %1189 = vmatprep.subr.mxu0 0.0
    %1190 = vmatpush1.msra.mxu0 %v382
    %1191 = vmatprep.subr.mxu0 0.0
    %1192 = vmatpush1.msra.mxu0 %v385
    %1193 = vmatprep.subr.mxu0 0.0
    %1194 = vmatpush1.msra.mxu0 %v388
    %1195 = vmatprep.subr.mxu0 0.0
    %1196 = vmatpush1.msra.mxu0 %v391
    %1197 = vmatprep.subr.mxu0 0.0
    %1198 = vmatpush1.msra.mxu0 %v394
    %1199 = vmatprep.subr.mxu0 0.0
    %1200 = vmatpush1.msra.mxu0 %v397
    %1201 = vmatprep.subr.mxu0 0.0
    %1202 = vmatpush1.msra.mxu0 %v400
    %1203 = vmatprep.subr.mxu0 0.0
    %1204 = vmatpush1.msra.mxu0 %v403
    %1205 = vmatprep.subr.mxu0 0.0
    %1206 = vmatpush1.msra.mxu0 %v406
    %1207 = vmatprep.subr.mxu0 0.0
    %1208 = vmatpush1.msra.mxu0 %v409
    %1209 = vmatprep.subr.mxu0 0.0
    %1210 = vmatpush1.msra.mxu0 %v412
    %1211 = vmatprep.subr.mxu0 0.0
    %1212 = vmatpush1.msra.mxu0 %v415
    %1213 = vmatprep.subr.mxu0 0.0
    %1214 = vmatpush1.msra.mxu0 %v418
    %1215 = vmatprep.subr.mxu0 0.0
    %1216 = vmatpush1.msra.mxu0 %v421
    %1217 = vmatprep.subr.mxu0 0.0
    %1218 = vmatpush1.msra.mxu0 %v424
    %1219 = vmatprep.subr.mxu0 0.0
    %1220 = vmatpush1.msra.mxu0 %v427
    %1221 = vmatprep.subr.mxu0 0.0
    %1222 = vmatpush1.msra.mxu0 0.0
    %1223 = vmatprep.subr.mxu0 0.0
    %1224 = vmatpush1.msra.mxu0 0.0
    %1225 = vmatprep.subr.mxu0 0.0
    %1226 = vmatpush1.msra.mxu0 0.0
    %1227 = vmatprep.subr.mxu0 0.0
    %1228 = vmatpush1.msra.mxu0 0.0
    %1229 = vmatprep.subr.mxu0 0.0
    %1230 = vmatpush1.msra.mxu0 0.0
    %1231 = vmatprep.subr.mxu0 0.0
    %1232 = vmatpush1.msra.mxu0 0.0
    %1233 = vmatprep.subr.mxu0 0.0
    %1234 = vmatpush1.msra.mxu0 0.0
    %1235 = vmatprep.subr.mxu0 0.0
    %1236 = vmatpush1.msra.mxu0 0.0
    %1237 = vmatprep.subr.mxu0 0.0
    %1238 = vmatpush1.msra.mxu0 0.0
    %1239 = vmatprep.subr.mxu0 0.0
    %1240 = vmatpush1.msra.mxu0 0.0
    %1241 = vmatprep.subr.mxu0 0.0
    %1242 = vmatpush1.msra.mxu0 0.0
    %1243 = vmatprep.subr.mxu0 0.0
    %1244 = vmatpush1.msra.mxu0 0.0
    %1245 = vmatprep.subr.mxu0 0.0
    %1246 = vmatpush1.msra.mxu0 0.0
    %1247 = vmatprep.subr.mxu0 0.0
    %1248 = vmatpush1.msra.mxu0 0.0
    %1249 = vmatprep.subr.mxu0 0.0
    %1250 = vmatpush1.msra.mxu0 0.0
    %1251 = vmatprep.subr.mxu0 0.0
    %1252 = vmatpush1.msra.mxu0 0.0
    %1253 = vmatprep.mubr.f32.mxu0 0.0
    %1254 = vmatmul.mubr.f32.gmra.mrb[0].mxu0 %v1111
    %v1255 = vpop.f32.mrb[0].mxu0
    %v1256 = vadd.f32 0.0, %v1255
    %v1257 = vpop.f32.mrb[0].mxu0
    %1258 = vdwg.mxu0
    %v1259 = vadd.f32 %v1115, %v1185
    %v1260 = vxor.u32 %v1259, 2147483648
    %v1261 = vmul.f32 %v1260, 1.442695
    %v1262 = vpow.pop %v1261
    %v1263 = vadd.f32 %v1262, 1.0
    %v1264 = vrcp.pop %v1263
    %v1265 = vmul.f32 1.0, %v1264
    %v1266 = vadd.f32 %v1116, %v1187
    %v1267 = vxor.u32 %v1266, 2147483648
    %v1268 = vmul.f32 %v1267, 1.442695
    %v1269 = vpow.pop %v1268
    %v1270 = vadd.f32 %v1269, 1.0
    %v1271 = vrcp.pop %v1270
    %v1272 = vmul.f32 1.0, %v1271
    %v1273 = vadd.f32 %v1256, %v433
    %v1274 = vmul.f32 %v1265, %v1273
    %v1275 = vadd.f32 %v1117, %v1274
    %v1276 = vtanh.pop %v1275
    %v1277 = vsub.f32 1.0, %v1272
    %v1278 = vmul.f32 %v1277, %v1276
    %v1279 = vmul.f32 %v1272, %v1111
    %v1280 = vadd.f32 %v1278, %v1279
    %s1281 = smul.u32 5, 3
    %s1282 = smul.addr %s1281, 8
    %s1283 = scalar_lea.vmem [#allocation3], %s1282
    %v1284 = vld [vmem:[%s1283] sm:$0xff]
    %v1285 = vld [vmem:[%s1283 + $0x8] sm:$0xff]
    %v1286 = vld [vmem:[%s1283 + $0x10] sm:$0xff]
    %1287 = vmatprep.subr.mxu0 %v381
    %1288 = vmatpush1.msra.mxu0 %v380
    %1289 = vmatprep.subr.mxu0 %v384
    %1290 = vmatpush1.msra.mxu0 %v383
    %1291 = vmatprep.subr.mxu0 %v387
    %1292 = vmatpush1.msra.mxu0 %v386
    %1293 = vmatprep.subr.mxu0 %v390
    %1294 = vmatpush1.msra.mxu0 %v389
    %1295 = vmatprep.subr.mxu0 %v393
    %1296 = vmatpush1.msra.mxu0 %v392
    %1297 = vmatprep.subr.mxu0 %v396
    %1298 = vmatpush1.msra.mxu0 %v395
    %1299 = vmatprep.subr.mxu0 %v399
    %1300 = vmatpush1.msra.mxu0 %v398
    %1301 = vmatprep.subr.mxu0 %v402
    %1302 = vmatpush1.msra.mxu0 %v401
    %1303 = vmatprep.subr.mxu0 %v405
    %1304 = vmatpush1.msra.mxu0 %v404
    %1305 = vmatprep.subr.mxu0 %v408
    %1306 = vmatpush1.msra.mxu0 %v407
    %1307 = vmatprep.subr.mxu0 %v411
    %1308 = vmatpush1.msra.mxu0 %v410
    %1309 = vmatprep.subr.mxu0 %v414
    %1310 = vmatpush1.msra.mxu0 %v413
    %1311 = vmatprep.subr.mxu0 %v417
    %1312 = vmatpush1.msra.mxu0 %v416
    %1313 = vmatprep.subr.mxu0 %v420
    %1314 = vmatpush1.msra.mxu0 %v419
    %1315 = vmatprep.subr.mxu0 %v423
    %1316 = vmatpush1.msra.mxu0 %v422
    %1317 = vmatprep.subr.mxu0 %v426
    %1318 = vmatpush1.msra.mxu0 %v425
    %1319 = vmatprep.subr.mxu0 0.0
    %1320 = vmatpush1.msra.mxu0 0.0
    %1321 = vmatprep.subr.mxu0 0.0
    %1322 = vmatpush1.msra.mxu0 0.0
    %1323 = vmatprep.subr.mxu0 0.0
    %1324 = vmatpush1.msra.mxu0 0.0
    %1325 = vmatprep.subr.mxu0 0.0
    %1326 = vmatpush1.msra.mxu0 0.0
    %1327 = vmatprep.subr.mxu0 0.0
    %1328 = vmatpush1.msra.mxu0 0.0
    %1329 = vmatprep.subr.mxu0 0.0
    %1330 = vmatpush1.msra.mxu0 0.0
    %1331 = vmatprep.subr.mxu0 0.0
    %1332 = vmatpush1.msra.mxu0 0.0
    %1333 = vmatprep.subr.mxu0 0.0
    %1334 = vmatpush1.msra.mxu0 0.0
    %1335 = vmatprep.subr.mxu0 0.0
    %1336 = vmatpush1.msra.mxu0 0.0
    %1337 = vmatprep.subr.mxu0 0.0
    %1338 = vmatpush1.msra.mxu0 0.0
    %1339 = vmatprep.subr.mxu0 0.0
    %1340 = vmatpush1.msra.mxu0 0.0
    %1341 = vmatprep.subr.mxu0 0.0
    %1342 = vmatpush1.msra.mxu0 0.0
    %1343 = vmatprep.subr.mxu0 0.0
    %1344 = vmatpush1.msra.mxu0 0.0
    %1345 = vmatprep.subr.mxu0 0.0
    %1346 = vmatpush1.msra.mxu0 0.0
    %1347 = vmatprep.subr.mxu0 0.0
    %1348 = vmatpush1.msra.mxu0 0.0
    %1349 = vmatprep.subr.mxu0 0.0
    %1350 = vmatpush1.msra.mxu0 0.0
    %1351 = vmatprep.mubr.f32.mxu0 0.0
    %1352 = vmatmul.mubr.f32.gmra.mrb[0].mxu0 %v1280
    %v1353 = vpop.f32.mrb[0].mxu0
    %v1354 = vadd.f32 0.0, %v1353
    %v1355 = vpop.f32.mrb[0].mxu0
    %v1356 = vadd.f32 0.0, %v1355
    %1357 = vdwg.mxu0
    %1358 = vmatprep.subr.mxu0 0.0
    %1359 = vmatpush1.msra.mxu0 %v382
    %1360 = vmatprep.subr.mxu0 0.0
    %1361 = vmatpush1.msra.mxu0 %v385
    %1362 = vmatprep.subr.mxu0 0.0
    %1363 = vmatpush1.msra.mxu0 %v388
    %1364 = vmatprep.subr.mxu0 0.0
    %1365 = vmatpush1.msra.mxu0 %v391
    %1366 = vmatprep.subr.mxu0 0.0
    %1367 = vmatpush1.msra.mxu0 %v394
    %1368 = vmatprep.subr.mxu0 0.0
    %1369 = vmatpush1.msra.mxu0 %v397
    %1370 = vmatprep.subr.mxu0 0.0
    %1371 = vmatpush1.msra.mxu0 %v400
    %1372 = vmatprep.subr.mxu0 0.0
    %1373 = vmatpush1.msra.mxu0 %v403
    %1374 = vmatprep.subr.mxu0 0.0
    %1375 = vmatpush1.msra.mxu0 %v406
    %1376 = vmatprep.subr.mxu0 0.0
    %1377 = vmatpush1.msra.mxu0 %v409
    %1378 = vmatprep.subr.mxu0 0.0
    %1379 = vmatpush1.msra.mxu0 %v412
    %1380 = vmatprep.subr.mxu0 0.0
    %1381 = vmatpush1.msra.mxu0 %v415
    %1382 = vmatprep.subr.mxu0 0.0
    %1383 = vmatpush1.msra.mxu0 %v418
    %1384 = vmatprep.subr.mxu0 0.0
    %1385 = vmatpush1.msra.mxu0 %v421
    %1386 = vmatprep.subr.mxu0 0.0
    %1387 = vmatpush1.msra.mxu0 %v424
    %1388 = vmatprep.subr.mxu0 0.0
    %1389 = vmatpush1.msra.mxu0 %v427
    %1390 = vmatprep.subr.mxu0 0.0
    %1391 = vmatpush1.msra.mxu0 0.0
    %1392 = vmatprep.subr.mxu0 0.0
    %1393 = vmatpush1.msra.mxu0 0.0
    %1394 = vmatprep.subr.mxu0 0.0
    %1395 = vmatpush1.msra.mxu0 0.0
    %1396 = vmatprep.subr.mxu0 0.0
    %1397 = vmatpush1.msra.mxu0 0.0
    %1398 = vmatprep.subr.mxu0 0.0
    %1399 = vmatpush1.msra.mxu0 0.0
    %1400 = vmatprep.subr.mxu0 0.0
    %1401 = vmatpush1.msra.mxu0 0.0
    %1402 = vmatprep.subr.mxu0 0.0
    %1403 = vmatpush1.msra.mxu0 0.0
    %1404 = vmatprep.subr.mxu0 0.0
    %1405 = vmatpush1.msra.mxu0 0.0
    %1406 = vmatprep.subr.mxu0 0.0
    %1407 = vmatpush1.msra.mxu0 0.0
    %1408 = vmatprep.subr.mxu0 0.0
    %1409 = vmatpush1.msra.mxu0 0.0
    %1410 = vmatprep.subr.mxu0 0.0
    %1411 = vmatpush1.msra.mxu0 0.0
    %1412 = vmatprep.subr.mxu0 0.0
    %1413 = vmatpush1.msra.mxu0 0.0
    %1414 = vmatprep.subr.mxu0 0.0
    %1415 = vmatpush1.msra.mxu0 0.0
    %1416 = vmatprep.subr.mxu0 0.0
    %1417 = vmatpush1.msra.mxu0 0.0
    %1418 = vmatprep.subr.mxu0 0.0
    %1419 = vmatpush1.msra.mxu0 0.0
    %1420 = vmatprep.subr.mxu0 0.0
    %1421 = vmatpush1.msra.mxu0 0.0
    %1422 = vmatprep.mubr.f32.mxu0 0.0
    %1423 = vmatmul.mubr.f32.gmra.mrb[0].mxu0 %v1280
    %v1424 = vpop.f32.mrb[0].mxu0
    %v1425 = vadd.f32 0.0, %v1424
    %v1426 = vpop.f32.mrb[0].mxu0
    %1427 = vdwg.mxu0
    %v1428 = vadd.f32 %v1284, %v1354
    %v1429 = vxor.u32 %v1428, 2147483648
    %v1430 = vmul.f32 %v1429, 1.442695
    %v1431 = vpow.pop %v1430
    %v1432 = vadd.f32 %v1431, 1.0
    %v1433 = vrcp.pop %v1432
    %v1434 = vmul.f32 1.0, %v1433
    %v1435 = vadd.f32 %v1285, %v1356
    %v1436 = vxor.u32 %v1435, 2147483648
    %v1437 = vmul.f32 %v1436, 1.442695
    %v1438 = vpow.pop %v1437
    %v1439 = vadd.f32 %v1438, 1.0
    %v1440 = vrcp.pop %v1439
    %v1441 = vmul.f32 1.0, %v1440
    %v1442 = vadd.f32 %v1425, %v433
    %v1443 = vmul.f32 %v1434, %v1442
    %v1444 = vadd.f32 %v1286, %v1443
    %v1445 = vtanh.pop %v1444
    %v1446 = vsub.f32 1.0, %v1441
    %v1447 = vmul.f32 %v1446, %v1445
    %v1448 = vmul.f32 %v1441, %v1280
    %v1449 = vadd.f32 %v1447, %v1448
    %s1450 = smul.u32 6, 3
    %s1451 = smul.addr %s1450, 8
    %s1452 = scalar_lea.vmem [#allocation3], %s1451
    %v1453 = vld [vmem:[%s1452] sm:$0xff]
    %v1454 = vld [vmem:[%s1452 + $0x8] sm:$0xff]
    %v1455 = vld [vmem:[%s1452 + $0x10] sm:$0xff]
    %1456 = vmatprep.subr.mxu0 %v381
    %1457 = vmatpush1.msra.mxu0 %v380
    %1458 = vmatprep.subr.mxu0 %v384
    %1459 = vmatpush1.msra.mxu0 %v383
    %1460 = vmatprep.subr.mxu0 %v387
    %1461 = vmatpush1.msra.mxu0 %v386
    %1462 = vmatprep.subr.mxu0 %v390
    %1463 = vmatpush1.msra.mxu0 %v389
    %1464 = vmatprep.subr.mxu0 %v393
    %1465 = vmatpush1.msra.mxu0 %v392
    %1466 = vmatprep.subr.mxu0 %v396
    %1467 = vmatpush1.msra.mxu0 %v395
    %1468 = vmatprep.subr.mxu0 %v399
    %1469 = vmatpush1.msra.mxu0 %v398
    %1470 = vmatprep.subr.mxu0 %v402
    %1471 = vmatpush1.msra.mxu0 %v401
    %1472 = vmatprep.subr.mxu0 %v405
    %1473 = vmatpush1.msra.mxu0 %v404
    %1474 = vmatprep.subr.mxu0 %v408
    %1475 = vmatpush1.msra.mxu0 %v407
    %1476 = vmatprep.subr.mxu0 %v411
    %1477 = vmatpush1.msra.mxu0 %v410
    %1478 = vmatprep.subr.mxu0 %v414
    %1479 = vmatpush1.msra.mxu0 %v413
    %1480 = vmatprep.subr.mxu0 %v417
    %1481 = vmatpush1.msra.mxu0 %v416
    %1482 = vmatprep.subr.mxu0 %v420
    %1483 = vmatpush1.msra.mxu0 %v419
    %1484 = vmatprep.subr.mxu0 %v423
    %1485 = vmatpush1.msra.mxu0 %v422
    %1486 = vmatprep.subr.mxu0 %v426
    %1487 = vmatpush1.msra.mxu0 %v425
    %1488 = vmatprep.subr.mxu0 0.0
    %1489 = vmatpush1.msra.mxu0 0.0
    %1490 = vmatprep.subr.mxu0 0.0
    %1491 = vmatpush1.msra.mxu0 0.0
    %1492 = vmatprep.subr.mxu0 0.0
    %1493 = vmatpush1.msra.mxu0 0.0
    %1494 = vmatprep.subr.mxu0 0.0
    %1495 = vmatpush1.msra.mxu0 0.0
    %1496 = vmatprep.subr.mxu0 0.0
    %1497 = vmatpush1.msra.mxu0 0.0
    %1498 = vmatprep.subr.mxu0 0.0
    %1499 = vmatpush1.msra.mxu0 0.0
    %1500 = vmatprep.subr.mxu0 0.0
    %1501 = vmatpush1.msra.mxu0 0.0
    %1502 = vmatprep.subr.mxu0 0.0
    %1503 = vmatpush1.msra.mxu0 0.0
    %1504 = vmatprep.subr.mxu0 0.0
    %1505 = vmatpush1.msra.mxu0 0.0
    %1506 = vmatprep.subr.mxu0 0.0
    %1507 = vmatpush1.msra.mxu0 0.0
    %1508 = vmatprep.subr.mxu0 0.0
    %1509 = vmatpush1.msra.mxu0 0.0
    %1510 = vmatprep.subr.mxu0 0.0
    %1511 = vmatpush1.msra.mxu0 0.0
    %1512 = vmatprep.subr.mxu0 0.0
    %1513 = vmatpush1.msra.mxu0 0.0
    %1514 = vmatprep.subr.mxu0 0.0
    %1515 = vmatpush1.msra.mxu0 0.0
    %1516 = vmatprep.subr.mxu0 0.0
    %1517 = vmatpush1.msra.mxu0 0.0
    %1518 = vmatprep.subr.mxu0 0.0
    %1519 = vmatpush1.msra.mxu0 0.0
    %1520 = vmatprep.mubr.f32.mxu0 0.0
    %1521 = vmatmul.mubr.f32.gmra.mrb[0].mxu0 %v1449
    %v1522 = vpop.f32.mrb[0].mxu0
    %v1523 = vadd.f32 0.0, %v1522
    %v1524 = vpop.f32.mrb[0].mxu0
    %v1525 = vadd.f32 0.0, %v1524
    %1526 = vdwg.mxu0
    %1527 = vmatprep.subr.mxu0 0.0
    %1528 = vmatpush1.msra.mxu0 %v382
    %1529 = vmatprep.subr.mxu0 0.0
    %1530 = vmatpush1.msra.mxu0 %v385
    %1531 = vmatprep.subr.mxu0 0.0
    %1532 = vmatpush1.msra.mxu0 %v388
    %1533 = vmatprep.subr.mxu0 0.0
    %1534 = vmatpush1.msra.mxu0 %v391
    %1535 = vmatprep.subr.mxu0 0.0
    %1536 = vmatpush1.msra.mxu0 %v394
    %1537 = vmatprep.subr.mxu0 0.0
    %1538 = vmatpush1.msra.mxu0 %v397
    %1539 = vmatprep.subr.mxu0 0.0
    %1540 = vmatpush1.msra.mxu0 %v400
    %1541 = vmatprep.subr.mxu0 0.0
    %1542 = vmatpush1.msra.mxu0 %v403
    %1543 = vmatprep.subr.mxu0 0.0
    %1544 = vmatpush1.msra.mxu0 %v406
    %1545 = vmatprep.subr.mxu0 0.0
    %1546 = vmatpush1.msra.mxu0 %v409
    %1547 = vmatprep.subr.mxu0 0.0
    %1548 = vmatpush1.msra.mxu0 %v412
    %1549 = vmatprep.subr.mxu0 0.0
    %1550 = vmatpush1.msra.mxu0 %v415
    %1551 = vmatprep.subr.mxu0 0.0
    %1552 = vmatpush1.msra.mxu0 %v418
    %1553 = vmatprep.subr.mxu0 0.0
    %1554 = vmatpush1.msra.mxu0 %v421
    %1555 = vmatprep.subr.mxu0 0.0
    %1556 = vmatpush1.msra.mxu0 %v424
    %1557 = vmatprep.subr.mxu0 0.0
    %1558 = vmatpush1.msra.mxu0 %v427
    %1559 = vmatprep.subr.mxu0 0.0
    %1560 = vmatpush1.msra.mxu0 0.0
    %1561 = vmatprep.subr.mxu0 0.0
    %1562 = vmatpush1.msra.mxu0 0.0
    %1563 = vmatprep.subr.mxu0 0.0
    %1564 = vmatpush1.msra.mxu0 0.0
    %1565 = vmatprep.subr.mxu0 0.0
    %1566 = vmatpush1.msra.mxu0 0.0
    %1567 = vmatprep.subr.mxu0 0.0
    %1568 = vmatpush1.msra.mxu0 0.0
    %1569 = vmatprep.subr.mxu0 0.0
    %1570 = vmatpush1.msra.mxu0 0.0
    %1571 = vmatprep.subr.mxu0 0.0
    %1572 = vmatpush1.msra.mxu0 0.0
    %1573 = vmatprep.subr.mxu0 0.0
    %1574 = vmatpush1.msra.mxu0 0.0
    %1575 = vmatprep.subr.mxu0 0.0
    %1576 = vmatpush1.msra.mxu0 0.0
    %1577 = vmatprep.subr.mxu0 0.0
    %1578 = vmatpush1.msra.mxu0 0.0
    %1579 = vmatprep.subr.mxu0 0.0
    %1580 = vmatpush1.msra.mxu0 0.0
    %1581 = vmatprep.subr.mxu0 0.0
    %1582 = vmatpush1.msra.mxu0 0.0
    %1583 = vmatprep.subr.mxu0 0.0
    %1584 = vmatpush1.msra.mxu0 0.0
    %1585 = vmatprep.subr.mxu0 0.0
    %1586 = vmatpush1.msra.mxu0 0.0
    %1587 = vmatprep.subr.mxu0 0.0
    %1588 = vmatpush1.msra.mxu0 0.0
    %1589 = vmatprep.subr.mxu0 0.0
    %1590 = vmatpush1.msra.mxu0 0.0
    %1591 = vmatprep.mubr.f32.mxu0 0.0
    %1592 = vmatmul.mubr.f32.gmra.mrb[0].mxu0 %v1449
    %v1593 = vpop.f32.mrb[0].mxu0
    %v1594 = vadd.f32 0.0, %v1593
    %v1595 = vpop.f32.mrb[0].mxu0
    %1596 = vdwg.mxu0
    %v1597 = vadd.f32 %v1453, %v1523
    %v1598 = vxor.u32 %v1597, 2147483648
    %v1599 = vmul.f32 %v1598, 1.442695
    %v1600 = vpow.pop %v1599
    %v1601 = vadd.f32 %v1600, 1.0
    %v1602 = vrcp.pop %v1601
    %v1603 = vmul.f32 1.0, %v1602
    %v1604 = vadd.f32 %v1454, %v1525
    %v1605 = vxor.u32 %v1604, 2147483648
    %v1606 = vmul.f32 %v1605, 1.442695
    %v1607 = vpow.pop %v1606
    %v1608 = vadd.f32 %v1607, 1.0
    %v1609 = vrcp.pop %v1608
    %v1610 = vmul.f32 1.0, %v1609
    %v1611 = vadd.f32 %v1594, %v433
    %v1612 = vmul.f32 %v1603, %v1611
    %v1613 = vadd.f32 %v1455, %v1612
    %v1614 = vtanh.pop %v1613
    %v1615 = vsub.f32 1.0, %v1610
    %v1616 = vmul.f32 %v1615, %v1614
    %v1617 = vmul.f32 %v1610, %v1449
    %v1618 = vadd.f32 %v1616, %v1617
    %s1619 = smul.u32 7, 3
    %s1620 = smul.addr %s1619, 8
    %s1621 = scalar_lea.vmem [#allocation3], %s1620
    %v1622 = vld [vmem:[%s1621] sm:$0xff]
    %v1623 = vld [vmem:[%s1621 + $0x8] sm:$0xff]
    %v1624 = vld [vmem:[%s1621 + $0x10] sm:$0xff]
    %1625 = vmatprep.subr.mxu0 %v381
    %1626 = vmatpush1.msra.mxu0 %v380
    %1627 = vmatprep.subr.mxu0 %v384
    %1628 = vmatpush1.msra.mxu0 %v383
    %1629 = vmatprep.subr.mxu0 %v387
    %1630 = vmatpush1.msra.mxu0 %v386
    %1631 = vmatprep.subr.mxu0 %v390
    %1632 = vmatpush1.msra.mxu0 %v389
    %1633 = vmatprep.subr.mxu0 %v393
    %1634 = vmatpush1.msra.mxu0 %v392
    %1635 = vmatprep.subr.mxu0 %v396
    %1636 = vmatpush1.msra.mxu0 %v395
    %1637 = vmatprep.subr.mxu0 %v399
    %1638 = vmatpush1.msra.mxu0 %v398
    %1639 = vmatprep.subr.mxu0 %v402
    %1640 = vmatpush1.msra.mxu0 %v401
    %1641 = vmatprep.subr.mxu0 %v405
    %1642 = vmatpush1.msra.mxu0 %v404
    %1643 = vmatprep.subr.mxu0 %v408
    %1644 = vmatpush1.msra.mxu0 %v407
    %1645 = vmatprep.subr.mxu0 %v411
    %1646 = vmatpush1.msra.mxu0 %v410
    %1647 = vmatprep.subr.mxu0 %v414
    %1648 = vmatpush1.msra.mxu0 %v413
    %1649 = vmatprep.subr.mxu0 %v417
    %1650 = vmatpush1.msra.mxu0 %v416
    %1651 = vmatprep.subr.mxu0 %v420
    %1652 = vmatpush1.msra.mxu0 %v419
    %1653 = vmatprep.subr.mxu0 %v423
    %1654 = vmatpush1.msra.mxu0 %v422
    %1655 = vmatprep.subr.mxu0 %v426
    %1656 = vmatpush1.msra.mxu0 %v425
    %1657 = vmatprep.subr.mxu0 0.0
    %1658 = vmatpush1.msra.mxu0 0.0
    %1659 = vmatprep.subr.mxu0 0.0
    %1660 = vmatpush1.msra.mxu0 0.0
    %1661 = vmatprep.subr.mxu0 0.0
    %1662 = vmatpush1.msra.mxu0 0.0
    %1663 = vmatprep.subr.mxu0 0.0
    %1664 = vmatpush1.msra.mxu0 0.0
    %1665 = vmatprep.subr.mxu0 0.0
    %1666 = vmatpush1.msra.mxu0 0.0
    %1667 = vmatprep.subr.mxu0 0.0
    %1668 = vmatpush1.msra.mxu0 0.0
    %1669 = vmatprep.subr.mxu0 0.0
    %1670 = vmatpush1.msra.mxu0 0.0
    %1671 = vmatprep.subr.mxu0 0.0
    %1672 = vmatpush1.msra.mxu0 0.0
    %1673 = vmatprep.subr.mxu0 0.0
    %1674 = vmatpush1.msra.mxu0 0.0
    %1675 = vmatprep.subr.mxu0 0.0
    %1676 = vmatpush1.msra.mxu0 0.0
    %1677 = vmatprep.subr.mxu0 0.0
    %1678 = vmatpush1.msra.mxu0 0.0
    %1679 = vmatprep.subr.mxu0 0.0
    %1680 = vmatpush1.msra.mxu0 0.0
    %1681 = vmatprep.subr.mxu0 0.0
    %1682 = vmatpush1.msra.mxu0 0.0
    %1683 = vmatprep.subr.mxu0 0.0
    %1684 = vmatpush1.msra.mxu0 0.0
    %1685 = vmatprep.subr.mxu0 0.0
    %1686 = vmatpush1.msra.mxu0 0.0
    %1687 = vmatprep.subr.mxu0 0.0
    %1688 = vmatpush1.msra.mxu0 0.0
    %1689 = vmatprep.mubr.f32.mxu0 0.0
    %1690 = vmatmul.mubr.f32.gmra.mrb[0].mxu0 %v1618
    %v1691 = vpop.f32.mrb[0].mxu0
    %v1692 = vadd.f32 0.0, %v1691
    %v1693 = vpop.f32.mrb[0].mxu0
    %v1694 = vadd.f32 0.0, %v1693
    %1695 = vdwg.mxu0
    %1696 = vmatprep.subr.mxu0 0.0
    %1697 = vmatpush1.msra.mxu0 %v382
    %1698 = vmatprep.subr.mxu0 0.0
    %1699 = vmatpush1.msra.mxu0 %v385
    %1700 = vmatprep.subr.mxu0 0.0
    %1701 = vmatpush1.msra.mxu0 %v388
    %1702 = vmatprep.subr.mxu0 0.0
    %1703 = vmatpush1.msra.mxu0 %v391
    %1704 = vmatprep.subr.mxu0 0.0
    %1705 = vmatpush1.msra.mxu0 %v394
    %1706 = vmatprep.subr.mxu0 0.0
    %1707 = vmatpush1.msra.mxu0 %v397
    %1708 = vmatprep.subr.mxu0 0.0
    %1709 = vmatpush1.msra.mxu0 %v400
    %1710 = vmatprep.subr.mxu0 0.0
    %1711 = vmatpush1.msra.mxu0 %v403
    %1712 = vmatprep.subr.mxu0 0.0
    %1713 = vmatpush1.msra.mxu0 %v406
    %1714 = vmatprep.subr.mxu0 0.0
    %1715 = vmatpush1.msra.mxu0 %v409
    %1716 = vmatprep.subr.mxu0 0.0
    %1717 = vmatpush1.msra.mxu0 %v412
    %1718 = vmatprep.subr.mxu0 0.0
    %1719 = vmatpush1.msra.mxu0 %v415
    %1720 = vmatprep.subr.mxu0 0.0
    %1721 = vmatpush1.msra.mxu0 %v418
    %1722 = vmatprep.subr.mxu0 0.0
    %1723 = vmatpush1.msra.mxu0 %v421
    %1724 = vmatprep.subr.mxu0 0.0
    %1725 = vmatpush1.msra.mxu0 %v424
    %1726 = vmatprep.subr.mxu0 0.0
    %1727 = vmatpush1.msra.mxu0 %v427
    %1728 = vmatprep.subr.mxu0 0.0
    %1729 = vmatpush1.msra.mxu0 0.0
    %1730 = vmatprep.subr.mxu0 0.0
    %1731 = vmatpush1.msra.mxu0 0.0
    %1732 = vmatprep.subr.mxu0 0.0
    %1733 = vmatpush1.msra.mxu0 0.0
    %1734 = vmatprep.subr.mxu0 0.0
    %1735 = vmatpush1.msra.mxu0 0.0
    %1736 = vmatprep.subr.mxu0 0.0
    %1737 = vmatpush1.msra.mxu0 0.0
    %1738 = vmatprep.subr.mxu0 0.0
    %1739 = vmatpush1.msra.mxu0 0.0
    %1740 = vmatprep.subr.mxu0 0.0
    %1741 = vmatpush1.msra.mxu0 0.0
    %1742 = vmatprep.subr.mxu0 0.0
    %1743 = vmatpush1.msra.mxu0 0.0
    %1744 = vmatprep.subr.mxu0 0.0
    %1745 = vmatpush1.msra.mxu0 0.0
    %1746 = vmatprep.subr.mxu0 0.0
    %1747 = vmatpush1.msra.mxu0 0.0
    %1748 = vmatprep.subr.mxu0 0.0
    %1749 = vmatpush1.msra.mxu0 0.0
    %1750 = vmatprep.subr.mxu0 0.0
    %1751 = vmatpush1.msra.mxu0 0.0
    %1752 = vmatprep.subr.mxu0 0.0
    %1753 = vmatpush1.msra.mxu0 0.0
    %1754 = vmatprep.subr.mxu0 0.0
    %1755 = vmatpush1.msra.mxu0 0.0
    %1756 = vmatprep.subr.mxu0 0.0
    %1757 = vmatpush1.msra.mxu0 0.0
    %1758 = vmatprep.subr.mxu0 0.0
    %1759 = vmatpush1.msra.mxu0 0.0
    %1760 = vmatprep.mubr.f32.mxu0 0.0
    %1761 = vmatmul.mubr.f32.gmra.mrb[0].mxu0 %v1618
    %v1762 = vpop.f32.mrb[0].mxu0
    %v1763 = vadd.f32 0.0, %v1762
    %v1764 = vpop.f32.mrb[0].mxu0
    %1765 = vdwg.mxu0
    %v1766 = vadd.f32 %v1622, %v1692
    %v1767 = vxor.u32 %v1766, 2147483648
    %v1768 = vmul.f32 %v1767, 1.442695
    %v1769 = vpow.pop %v1768
    %v1770 = vadd.f32 %v1769, 1.0
    %v1771 = vrcp.pop %v1770
    %v1772 = vmul.f32 1.0, %v1771
    %v1773 = vadd.f32 %v1623, %v1694
    %v1774 = vxor.u32 %v1773, 2147483648
    %v1775 = vmul.f32 %v1774, 1.442695
    %v1776 = vpow.pop %v1775
    %v1777 = vadd.f32 %v1776, 1.0
    %v1778 = vrcp.pop %v1777
    %v1779 = vmul.f32 1.0, %v1778
    %v1780 = vadd.f32 %v1763, %v433
    %v1781 = vmul.f32 %v1772, %v1780
    %v1782 = vadd.f32 %v1624, %v1781
    %v1783 = vtanh.pop %v1782
    %v1784 = vsub.f32 1.0, %v1779
    %v1785 = vmul.f32 %v1784, %v1783
    %v1786 = vmul.f32 %v1779, %v1618
    %v1787 = vadd.f32 %v1785, %v1786
    %1788 = vst [vmem:[#allocation2] sm:$0xff] %v1787
    // Predicated region
    $region42: #{tpu_custom_call.1} parent=1 // pred_check
      %p1789 = pneg %p77
    $region43: #{tpu_custom_call.1} parent=1 // pred_check_branch
      %1791 = sbr.rel (%p1789) target = $region45
    $region44: #{tpu_custom_call.1} parent=1 // pred_region
      %v1792 = vld [vmem:[#allocation2] sm:$0xff]
      %v1793 = vld [vmem:[#allocation7] sm:$0xff]
      %v1794 = vld [vmem:[#allocation7 + $0x8] sm:$0xff]
      %v1795 = vld [vmem:[#allocation7 + $0x10] sm:$0xff]
      %v1796 = vld [vmem:[#allocation7 + $0x18] sm:$0xff]
      %v1797 = vld [vmem:[#allocation7 + $0x20] sm:$0xff]
      %v1798 = vld [vmem:[#allocation7 + $0x28] sm:$0xff]
      %v1799 = vld [vmem:[#allocation7 + $0x30] sm:$0xff]
      %v1800 = vld [vmem:[#allocation7 + $0x38] sm:$0xff]
      %v1801 = vld [vmem:[#allocation7 + $0x40] sm:$0xff]
      %v1802 = vld [vmem:[#allocation7 + $0x48] sm:$0xff]
      %v1803 = vld [vmem:[#allocation7 + $0x50] sm:$0xff]
      %v1804 = vld [vmem:[#allocation7 + $0x58] sm:$0xff]
      %v1805 = vld [vmem:[#allocation7 + $0x60] sm:$0xff]
      %v1806 = vld [vmem:[#allocation7 + $0x68] sm:$0xff]
      %v1807 = vld [vmem:[#allocation7 + $0x70] sm:$0xff]
      %v1808 = vld [vmem:[#allocation7 + $0x78] sm:$0xff]
      %v1809 = vld [vmem:[%s6] sm:$0x1]
      %v1811 = vlaneseq
      %v1812 = vshrl.u32 %v1811, 7
      %v1813 = vsub.s32 0, %v1812
      %v1814 = vrot.slane %v1809, %v1813
      %1816 = vmatprep.subr.mxu0 0.0
      %1817 = vmatpush1.msra.mxu0 %v1793
      %1818 = vmatprep.subr.mxu0 0.0
      %1819 = vmatpush1.msra.mxu0 %v1794
      %1820 = vmatprep.subr.mxu0 0.0
      %1821 = vmatpush1.msra.mxu0 %v1795
      %1822 = vmatprep.subr.mxu0 0.0
      %1823 = vmatpush1.msra.mxu0 %v1796
      %1824 = vmatprep.subr.mxu0 0.0
      %1825 = vmatpush1.msra.mxu0 %v1797
      %1826 = vmatprep.subr.mxu0 0.0
      %1827 = vmatpush1.msra.mxu0 %v1798
      %1828 = vmatprep.subr.mxu0 0.0
      %1829 = vmatpush1.msra.mxu0 %v1799
      %1830 = vmatprep.subr.mxu0 0.0
      %1831 = vmatpush1.msra.mxu0 %v1800
      %1832 = vmatprep.subr.mxu0 0.0
      %1833 = vmatpush1.msra.mxu0 %v1801
      %1834 = vmatprep.subr.mxu0 0.0
      %1835 = vmatpush1.msra.mxu0 %v1802
      %1836 = vmatprep.subr.mxu0 0.0
      %1837 = vmatpush1.msra.mxu0 %v1803
      %1838 = vmatprep.subr.mxu0 0.0
      %1839 = vmatpush1.msra.mxu0 %v1804
      %1840 = vmatprep.subr.mxu0 0.0
      %1841 = vmatpush1.msra.mxu0 %v1805
      %1842 = vmatprep.subr.mxu0 0.0
      %1843 = vmatpush1.msra.mxu0 %v1806
      %1844 = vmatprep.subr.mxu0 0.0
      %1845 = vmatpush1.msra.mxu0 %v1807
      %1846 = vmatprep.subr.mxu0 0.0
      %1847 = vmatpush1.msra.mxu0 %v1808
      %1848 = vmatprep.subr.mxu0 0.0
      %1849 = vmatpush1.msra.mxu0 0.0
      %1850 = vmatprep.subr.mxu0 0.0
      %1851 = vmatpush1.msra.mxu0 0.0
      %1852 = vmatprep.subr.mxu0 0.0
      %1853 = vmatpush1.msra.mxu0 0.0
      %1854 = vmatprep.subr.mxu0 0.0
      %1855 = vmatpush1.msra.mxu0 0.0
      %1856 = vmatprep.subr.mxu0 0.0
      %1857 = vmatpush1.msra.mxu0 0.0
      %1858 = vmatprep.subr.mxu0 0.0
      %1859 = vmatpush1.msra.mxu0 0.0
      %1860 = vmatprep.subr.mxu0 0.0
      %1861 = vmatpush1.msra.mxu0 0.0
      %1862 = vmatprep.subr.mxu0 0.0
      %1863 = vmatpush1.msra.mxu0 0.0
      %1864 = vmatprep.subr.mxu0 0.0
      %1865 = vmatpush1.msra.mxu0 0.0
      %1866 = vmatprep.subr.mxu0 0.0
      %1867 = vmatpush1.msra.mxu0 0.0
      %1868 = vmatprep.subr.mxu0 0.0
      %1869 = vmatpush1.msra.mxu0 0.0
      %1870 = vmatprep.subr.mxu0 0.0
      %1871 = vmatpush1.msra.mxu0 0.0
      %1872 = vmatprep.subr.mxu0 0.0
      %1873 = vmatpush1.msra.mxu0 0.0
      %1874 = vmatprep.subr.mxu0 0.0
      %1875 = vmatpush1.msra.mxu0 0.0
      %1876 = vmatprep.subr.mxu0 0.0
      %1877 = vmatpush1.msra.mxu0 0.0
      %1878 = vmatprep.subr.mxu0 0.0
      %1879 = vmatpush1.msra.mxu0 0.0
      %1880 = vmatprep.mubr.f32.mxu0 0.0
      %1881 = vmatmul.mubr.f32.gmra.mrb[0].mxu0 %v1792
      %v1882 = vpop.f32.mrb[0].mxu0
      %v1883 = vadd.f32 %v1814, %v1882
      %v1884 = vpop.f32.mrb[0].mxu0
      %1885 = vdwg.mxu0
      %1886 = vst [vmem:[#allocation9] sm:$0xff] %v1883
    $region45: #{tpu_custom_call.1} parent=1 // pred_fallthru
      _
    // Predicated region
    $region46: #{tpu_custom_call.1} parent=1 // pred_check
      _
    $region47: #{tpu_custom_call.1} parent=1 // pred_check_branch
      %1888 = sbr.rel (0) target = $region49
    $region48: #{tpu_custom_call.1} parent=1 // pred_region
      %s1890 = ssub.s32 128, 128
      %1891 = vsyncadd [#allocation6], %s1890
      %s1893 = sshll.u32 [#allocation9], 4
      %s1894 = int_to_ptr.vmem [resolvable:$true] %s1893
      %1896 = dma.vmem_to_hbm [thread:$0]  %s1894, 128, %s7, [#allocation6]
    $region49: #{tpu_custom_call.1} parent=1 // pred_fallthru
      _
    // Predicated region
    $region50: #{tpu_custom_call.1} parent=1 // pred_check
      _
    $region51: #{tpu_custom_call.1} parent=1 // pred_check_branch
      %1898 = sbr.rel (0) target = $region53
    $region52: #{tpu_custom_call.1} parent=1 // pred_region
      %1899 = dma.done [#allocation6], 128
    $region53: #{tpu_custom_call.1} parent=1 // pred_fallthru
      _
    %1900 = vsyncpa [#allocation5], 1
    %1901 = vsyncpa [#allocation8], 1
    %1902 = vsyncpa [#allocation6], 1

</llo_original>
